<compile_context>
chip_gen: v7x
topology: tpu7x:2x2x1
jax: 0.10.0
libtpu: 0.0.40
codegen_flags: <defaults>
</compile_context>

<pallas_src>
import functools
import math

import jax
import jax.numpy as jnp
from jax.experimental import pallas as pl
from jax.experimental.pallas import tpu as pltpu

# ---- small, shape-consistent config (ModelArgs scaled down) ----
DIM = 64           # args.dim
N_HEADS = 4        # args.n_heads
HEAD_DIM = DIM // N_HEADS
MAX_SEQ_LEN = 16   # args.max_seq_len
THETA = 10000.0
BATCH = 2
SEQ = 8
START_POS = 0


# ----------------------------- Pallas kernel -----------------------------

def attention_kernel(x_ref, wqkv_ref, wo_ref, cos_ref, sin_ref, mask_ref,
                     o_ref, *, n_heads, head_dim):
    S, D = x_ref.shape                                    # (S, D) row tile
    H, hd = n_heads, head_dim

    x = x_ref[...]                                        # (S, D) bf16
    # Fused {q, k, v} projection; 1/sqrt(hd) already folded into wq columns.
    qkv = jnp.dot(x, wqkv_ref[...],
                  preferred_element_type=jnp.float32)     # (S, 3D) fp32
    q = qkv[:, 0 * D:1 * D]
    k = qkv[:, 1 * D:2 * D]
    v = qkv[:, 2 * D:3 * D]

    # RoPE (interleaved-pair convention), fp32.  Pair swap via lane rotations
    # (XLU slot, free while MXU is the binding unit):
    #   swapped[2j] = u[2j+1],  swapped[2j+1] = u[2j]
    # The -1 sign on even lanes is folded into the host sin table.
    lane = jax.lax.broadcasted_iota(jnp.int32, (S, D), 1)
    even = (lane % 2) == 0

    def pair_swap(u):
        left = pltpu.roll(u, shift=D - 1, axis=1)         # u[i+1] (== shift -1)
        right = pltpu.roll(u, shift=1, axis=1)            # u[i-1]
        return jnp.where(even, left, right)

    cos = cos_ref[...]                                    # (S, D) fp32
    sin = sin_ref[...]                                    # (S, D) fp32, signed
    q = q * cos + pair_swap(q) * sin
    k = k * cos + pair_swap(k) * sin

    # Batched-head attention: single einsum path, no per-head Python loop.
    qh = jnp.transpose(q.reshape(S, H, hd), (1, 0, 2)).astype(jnp.bfloat16)
    kh = jnp.transpose(k.reshape(S, H, hd), (1, 0, 2)).astype(jnp.bfloat16)
    vh = jnp.transpose(v.reshape(S, H, hd), (1, 0, 2)).astype(jnp.bfloat16)

    s = jnp.einsum("hqd,hkd->hqk", qh, kh,
                   preferred_element_type=jnp.float32)    # (H, S, S) fp32
    s = s + mask_ref[...]                                 # broadcast (S, S)
    s = s - jnp.max(s, axis=-1, keepdims=True)
    p = jnp.exp(s)
    l = jnp.sum(p, axis=-1, keepdims=True)                # (H, S, 1)
    o = jnp.einsum("hqk,hkd->hqd", p.astype(jnp.bfloat16), vh,
                   preferred_element_type=jnp.float32)    # (H, S, hd) fp32
    # Flash-style: normalize after the PV matmul (hd elems/query, not S).
    o = o * pl.reciprocal(l, approx=False)

    attn = jnp.transpose(o, (1, 0, 2)).reshape(S, D)      # lane-dense (S, D)
    o_ref[...] = jnp.dot(attn.astype(jnp.bfloat16), wo_ref[...],
                         preferred_element_type=jnp.float32)


# ----------------------------- host-side helpers -----------------------------

def _rope_tables(head_dim, n_heads, seqlen, start_pos, max_seq_len, theta):
    # cos/sin tables in the packed (S, D) layout (heads contiguous, pairs
    # interleaved), matching precompute_freqs_cis + apply_rotary_emb.  The -1
    # sign needed on even output lanes of the RoPE pair swap is folded into
    # the sin table here (so the kernel does swap * sin with no sign select).
    freqs = 1.0 / (theta ** (jnp.arange(0, head_dim, 2, dtype=jnp.float32)
                             / head_dim))
    t = jnp.arange(max_seq_len * 2, dtype=jnp.float32)
    ang = jnp.outer(t, freqs)[start_pos:start_pos + seqlen]   # (S, hd/2)
    cos = jnp.repeat(jnp.cos(ang), 2, axis=-1)                # (S, hd)
    sin = jnp.repeat(jnp.sin(ang), 2, axis=-1)                # (S, hd)
    cos = jnp.tile(cos, (1, n_heads))                         # (S, D)
    sin = jnp.tile(sin, (1, n_heads))                         # (S, D)
    D = n_heads * head_dim
    sign = jnp.where(jnp.arange(D) % 2 == 0, -1.0, 1.0).astype(jnp.float32)
    return cos, sin * sign


def attention_forward(x, wq, wk, wv, wo, *, start_pos=0, mask=None,
                      n_heads=N_HEADS, max_seq_len=MAX_SEQ_LEN, theta=THETA):
    B, S, D = x.shape
    hd = D // n_heads
    cos, sin = _rope_tables(hd, n_heads, S, start_pos, max_seq_len, theta)

    # Fold 1/sqrt(head_dim) into wq (RoPE is linear => scores scale exactly).
    wqkv = jnp.concatenate([wq * (1.0 / math.sqrt(hd)), wk, wv],
                           axis=1).astype(jnp.bfloat16)        # (D, 3D)
    wo_b = wo.astype(jnp.bfloat16)
    if mask is None:
        mask = jnp.zeros((S, S), jnp.float32)
    else:
        mask = mask.astype(jnp.float32)
    x2 = x.reshape(B * S, D).astype(jnp.bfloat16)              # bf16 activations

    kern = functools.partial(attention_kernel, n_heads=n_heads, head_dim=hd)
    flops = (2 * B * S * D * 3 * D                 # fused qkv projection
             + 2 * B * n_heads * S * S * hd * 2    # scores + PV
             + 2 * B * S * D * D)                  # output projection
    bytes_accessed = (x2.size * 2 + wqkv.size * 2 + wo_b.size * 2
                      + cos.size * 4 + sin.size * 4 + mask.size * 4
                      + B * S * D * 4)

    out = pl.pallas_call(
        kern,
        out_shape=jax.ShapeDtypeStruct((B * S, D), jnp.float32),
        grid_spec=pltpu.PrefetchScalarGridSpec(
            num_scalar_prefetch=0,
            grid=(B,),                                         # >= 2 blocks
            in_specs=[
                pl.BlockSpec((S, D), lambda b: (b, 0)),        # x row tile
                pl.BlockSpec((D, 3 * D), lambda b: (0, 0)),    # resident wqkv
                pl.BlockSpec((D, D), lambda b: (0, 0)),        # resident wo
                pl.BlockSpec((S, D), lambda b: (0, 0)),        # cos (no B tile)
                pl.BlockSpec((S, D), lambda b: (0, 0)),        # sin (signed)
                pl.BlockSpec((S, S), lambda b: (0, 0)),        # additive mask
            ],
            out_specs=pl.BlockSpec((S, D), lambda b: (b, 0)),
        ),
        compiler_params=pltpu.CompilerParams(
            dimension_semantics=("parallel",),                 # megacore on v7x
            vmem_limit_bytes=64 * 1024 * 1024),
        cost_estimate=pl.CostEstimate(
            flops=int(flops),
            transcendentals=int(B * n_heads * S * S),
            bytes_accessed=int(bytes_accessed)),
    )(x2, wqkv, wo_b, cos, sin, mask)
    return out.reshape(B, S, D)


# ----------------------------- pure-JAX reference -----------------------------

def attention_reference(x, wq, wk, wv, wo, *, start_pos, mask, n_heads,
                        max_seq_len, theta):
    B, S, D = x.shape
    hd = D // n_heads
    q = (x @ wq).reshape(B, S, n_heads, hd)
    k = (x @ wk).reshape(B, S, n_heads, hd)
    v = (x @ wv).reshape(B, S, n_heads, hd)
    freqs = 1.0 / (theta ** (jnp.arange(0, hd, 2, dtype=jnp.float32) / hd))
    t = jnp.arange(max_seq_len * 2, dtype=jnp.float32)
    ang = jnp.outer(t, freqs)[start_pos:start_pos + S]     # (S, hd/2)
    c = jnp.cos(ang)[None, :, None, :]
    s_ = jnp.sin(ang)[None, :, None, :]

    def rope(u):
        ur = u.reshape(B, S, n_heads, hd // 2, 2)
        a, b = ur[..., 0], ur[..., 1]
        return jnp.stack([a * c - b * s_, a * s_ + b * c],
                         axis=-1).reshape(B, S, n_heads, hd)

    q, k = rope(q), rope(k)
    q = q.transpose(0, 2, 1, 3)
    k = k.transpose(0, 2, 1, 3)
    v = v.transpose(0, 2, 1, 3)
    scores = jnp.einsum("bhqd,bhkd->bhqk", q, k) / math.sqrt(hd)
    if mask is not None:
        scores = scores + mask
    p = jax.nn.softmax(scores, axis=-1)
    o = jnp.einsum("bhqk,bhkd->bhqd", p, v)
    return o.transpose(0, 2, 1, 3).reshape(B, S, D) @ wo


# ----------------------------- demo / self-check -----------------------------

if __name__ == "__main__":
    key = jax.random.PRNGKey(0)
    kx, kq, kk, kv, ko = jax.random.split(key, 5)
    x = jax.random.normal(kx, (BATCH, SEQ, DIM), jnp.float32)
    wq = 0.05 * jax.random.normal(kq, (DIM, DIM), jnp.float32)
    wk = 0.05 * jax.random.normal(kk, (DIM, DIM), jnp.float32)
    wv = 0.05 * jax.random.normal(kv, (DIM, DIM), jnp.float32)
    wo = 0.05 * jax.random.normal(ko, (DIM, DIM), jnp.float32)
    # Causal additive mask, as the LLaMA Transformer passes for seqlen > 1.
    mask = jnp.triu(jnp.full((SEQ, SEQ), float("-inf"), jnp.float32), k=1)

    out = attention_forward(x, wq, wk, wv, wo, start_pos=START_POS, mask=mask)
    out = jax.block_until_ready(out)

    ref = attention_reference(x, wq, wk, wv, wo, start_pos=START_POS,
                              mask=mask, n_heads=N_HEADS,
                              max_seq_len=MAX_SEQ_LEN, theta=THETA)

    assert out.shape == (BATCH, SEQ, DIM)
    assert bool(jnp.all(jnp.isfinite(out)))
    # bf16 matmul operands => loose tolerance vs the fp32 reference.
    assert bool(jnp.allclose(out, ref, atol=3e-2, rtol=3e-2))
    print("KERNEL_OK")
</pallas_src>

<mosaic_0001>
module attributes {stable_mosaic.version = 11 : i64} {
  func.func @attention_kernel(%arg0: i32, %arg1: memref<8x64xbf16, #tpu.memory_space<vmem>>, %arg2: memref<64x192xbf16, #tpu.memory_space<vmem>>, %arg3: memref<64x64xbf16, #tpu.memory_space<vmem>>, %arg4: memref<8x64xf32, #tpu.memory_space<vmem>>, %arg5: memref<8x64xf32, #tpu.memory_space<vmem>>, %arg6: memref<8x8xf32, #tpu.memory_space<vmem>>, %arg7: memref<8x64xf32, #tpu.memory_space<vmem>>) attributes {dimension_semantics = [#tpu.dimension_semantics<parallel>], iteration_bounds = array<i64: 2>, scalar_prefetch = 0 : i64, scratch_operands = 0 : i64, tpu.core_type = #tpu.core_type<tc>, window_params = [{transform_indices = @transform_0, window_bounds = array<i64: 8, 64>}, {pipeline_mode = #tpu.pipeline_mode<synchronous>, transform_indices = @transform_1, window_bounds = array<i64: 64, 192>}, {pipeline_mode = #tpu.pipeline_mode<synchronous>, transform_indices = @transform_2, window_bounds = array<i64: 64, 64>}, {pipeline_mode = #tpu.pipeline_mode<synchronous>, transform_indices = @transform_3, window_bounds = array<i64: 8, 64>}, {pipeline_mode = #tpu.pipeline_mode<synchronous>, transform_indices = @transform_4, window_bounds = array<i64: 8, 64>}, {pipeline_mode = #tpu.pipeline_mode<synchronous>, transform_indices = @transform_5, window_bounds = array<i64: 8, 8>}, {transform_indices = @transform_6, window_bounds = array<i64: 8, 64>}]} {
    %c0 = arith.constant 0 : index
    %c0_0 = arith.constant 0 : index
    %0 = vector.load %arg1[%c0, %c0_0] : memref<8x64xbf16, #tpu.memory_space<vmem>>, vector<8x64xbf16>
    %c0_1 = arith.constant 0 : index
    %c0_2 = arith.constant 0 : index
    %1 = vector.load %arg2[%c0_1, %c0_2] : memref<64x192xbf16, #tpu.memory_space<vmem>>, vector<64x192xbf16>
    %cst = arith.constant dense<0.000000e+00> : vector<8x192xf32>
    %2 = tpu.matmul %0, %1, %cst {dimension_numbers = #tpu.dot_dimension_numbers<[1], [0], [0], [1], [0, 0, 1, 1], [], []>} : vector<8x64xbf16>, vector<64x192xbf16>, vector<8x192xf32> -> vector<8x192xf32>
    %3 = vector.extract_strided_slice %2 {offsets = [0, 0], sizes = [8, 64], strides = [1, 1]} : vector<8x192xf32> to vector<8x64xf32>
    %4 = vector.extract_strided_slice %2 {offsets = [0, 64], sizes = [8, 64], strides = [1, 1]} : vector<8x192xf32> to vector<8x64xf32>
    %5 = vector.extract_strided_slice %2 {offsets = [0, 128], sizes = [8, 64], strides = [1, 1]} : vector<8x192xf32> to vector<8x64xf32>
    %6 = tpu.iota {dimensions = array<i32: 1>} : vector<8x64xi32>
    %c2_i32 = arith.constant 2 : i32
    %c0_i32 = arith.constant 0 : i32
    %7 = arith.cmpi eq, %c2_i32, %c0_i32 : i32
    %c1_i32 = arith.constant 1 : i32
    %8 = arith.select %7, %c1_i32, %c2_i32 : i32
    %9 = vector.broadcast %8 : i32 to vector<8x64xi32>
    %10 = arith.remsi %6, %9 : vector<8x64xi32>
    %c0_i32_3 = arith.constant 0 : i32
    %11 = vector.broadcast %c0_i32_3 : i32 to vector<8x64xi32>
    %12 = arith.cmpi ne, %10, %11 : vector<8x64xi32>
    %c0_i32_4 = arith.constant 0 : i32
    %13 = vector.broadcast %c0_i32_4 : i32 to vector<8x64xi32>
    %14 = arith.cmpi slt, %10, %13 : vector<8x64xi32>
    %c0_i32_5 = arith.constant 0 : i32
    %15 = arith.cmpi slt, %8, %c0_i32_5 : i32
    %16 = vector.broadcast %15 : i1 to vector<8x64xi1>
    %17 = vector.broadcast %16 : vector<8x64xi1> to vector<8x64xi1>
    %18 = arith.xori %14, %17 : vector<8x64xi1>
    %19 = arith.andi %18, %12 : vector<8x64xi1>
    %20 = vector.broadcast %8 : i32 to vector<8x64xi32>
    %21 = arith.addi %10, %20 : vector<8x64xi32>
    %22 = arith.select %19, %21, %10 : vector<8x64xi1>, vector<8x64xi32>
    %c0_i32_6 = arith.constant 0 : i32
    %23 = vector.broadcast %c0_i32_6 : i32 to vector<8x64xi32>
    %24 = arith.cmpi eq, %22, %23 : vector<8x64xi32>
    %c0_7 = arith.constant 0 : index
    %c0_8 = arith.constant 0 : index
    %25 = vector.load %arg4[%c0_7, %c0_8] : memref<8x64xf32, #tpu.memory_space<vmem>>, vector<8x64xf32>
    %c0_9 = arith.constant 0 : index
    %c0_10 = arith.constant 0 : index
    %26 = vector.load %arg5[%c0_9, %c0_10] : memref<8x64xf32, #tpu.memory_space<vmem>>, vector<8x64xf32>
    %27 = arith.mulf %3, %25 : vector<8x64xf32>
    %c63_i32 = arith.constant 63 : i32
    %28 = tpu.dynamic_rotate %3 by %c63_i32 dim 1 : vector<8x64xf32>, i32 -> vector<8x64xf32>
    %c1_i32_11 = arith.constant 1 : i32
    %29 = tpu.dynamic_rotate %3 by %c1_i32_11 dim 1 : vector<8x64xf32>, i32 -> vector<8x64xf32>
    %30 = arith.select %24, %28, %29 : vector<8x64xi1>, vector<8x64xf32>
    %31 = arith.mulf %30, %26 : vector<8x64xf32>
    %32 = arith.addf %27, %31 : vector<8x64xf32>
    %33 = arith.mulf %4, %25 : vector<8x64xf32>
    %c63_i32_12 = arith.constant 63 : i32
    %34 = tpu.dynamic_rotate %4 by %c63_i32_12 dim 1 : vector<8x64xf32>, i32 -> vector<8x64xf32>
    %c1_i32_13 = arith.constant 1 : i32
    %35 = tpu.dynamic_rotate %4 by %c1_i32_13 dim 1 : vector<8x64xf32>, i32 -> vector<8x64xf32>
    %36 = arith.select %24, %34, %35 : vector<8x64xi1>, vector<8x64xf32>
    %37 = arith.mulf %36, %26 : vector<8x64xf32>
    %38 = arith.addf %33, %37 : vector<8x64xf32>
    %39 = vector.shape_cast %32 : vector<8x64xf32> to vector<8x4x16xf32>
    %40 = tpu.transpose %39, [1, 0, 2] : vector<8x4x16xf32> -> vector<4x8x16xf32>
    %41 = arith.truncf %40 : vector<4x8x16xf32> to vector<4x8x16xbf16>
    %42 = vector.shape_cast %38 : vector<8x64xf32> to vector<8x4x16xf32>
    %43 = tpu.transpose %42, [1, 0, 2] : vector<8x4x16xf32> -> vector<4x8x16xf32>
    %44 = arith.truncf %43 : vector<4x8x16xf32> to vector<4x8x16xbf16>
    %45 = vector.shape_cast %5 : vector<8x64xf32> to vector<8x4x16xf32>
    %46 = tpu.transpose %45, [1, 0, 2] : vector<8x4x16xf32> -> vector<4x8x16xf32>
    %47 = arith.truncf %46 : vector<4x8x16xf32> to vector<4x8x16xbf16>
    "tpu.trace_start"() <{level = 10 : i32, message = "hqd,hkd->hqk"}> : () -> ()
    %cst_14 = arith.constant dense<0.000000e+00> : vector<4x8x8xf32>
    %48 = tpu.matmul %41, %44, %cst_14 {dimension_numbers = #tpu.dot_dimension_numbers<[2], [2], [1], [1], [0, 0, 0, 1, 1, 1], [0], [0]>} : vector<4x8x16xbf16>, vector<4x8x16xbf16>, vector<4x8x8xf32> -> vector<4x8x8xf32>
    "tpu.trace_stop"() : () -> ()
    %c0_15 = arith.constant 0 : index
    %c0_16 = arith.constant 0 : index
    %49 = vector.load %arg6[%c0_15, %c0_16] : memref<8x8xf32, #tpu.memory_space<vmem>>, vector<8x8xf32>
    %50 = vector.shape_cast %49 : vector<8x8xf32> to vector<1x8x8xf32>
    %51 = vector.broadcast %50 : vector<1x8x8xf32> to vector<4x8x8xf32>
    %52 = arith.addf %48, %51 : vector<4x8x8xf32>
    %cst_17 = arith.constant dense<0xFF800000> : vector<4x8xf32>
    %53 = vector.multi_reduction <maximumf>, %52, %cst_17 [2] : vector<4x8x8xf32> to vector<4x8xf32>
    %54 = vector.shape_cast %53 : vector<4x8xf32> to vector<4x8x1xf32>
    %55 = vector.broadcast %54 : vector<4x8x1xf32> to vector<4x8x8xf32>
    %56 = arith.subf %52, %55 : vector<4x8x8xf32>
    %57 = math.exp %56 : vector<4x8x8xf32>
    %cst_18 = arith.constant dense<0.000000e+00> : vector<4x8xf32>
    %58 = vector.multi_reduction <add>, %57, %cst_18 [2] : vector<4x8x8xf32> to vector<4x8xf32>
    %59 = vector.shape_cast %58 : vector<4x8xf32> to vector<4x8x1xf32>
    %60 = arith.truncf %57 : vector<4x8x8xf32> to vector<4x8x8xbf16>
    "tpu.trace_start"() <{level = 10 : i32, message = "hqk,hkd->hqd"}> : () -> ()
    %cst_19 = arith.constant dense<0.000000e+00> : vector<4x8x16xf32>
    %61 = tpu.matmul %60, %47, %cst_19 {dimension_numbers = #tpu.dot_dimension_numbers<[2], [1], [1], [2], [0, 0, 0, 1, 1, 2], [0], [0]>} : vector<4x8x8xbf16>, vector<4x8x16xbf16>, vector<4x8x16xf32> -> vector<4x8x16xf32>
    "tpu.trace_stop"() : () -> ()
    %62 = tpu.reciprocal %59 : vector<4x8x1xf32> -> vector<4x8x1xf32>
    %63 = vector.broadcast %62 : vector<4x8x1xf32> to vector<4x8x16xf32>
    %64 = arith.mulf %61, %63 : vector<4x8x16xf32>
    %65 = tpu.transpose %64, [1, 0, 2] : vector<4x8x16xf32> -> vector<8x4x16xf32>
    %66 = vector.shape_cast %65 : vector<8x4x16xf32> to vector<8x64xf32>
    %67 = arith.truncf %66 : vector<8x64xf32> to vector<8x64xbf16>
    %c0_20 = arith.constant 0 : index
    %c0_21 = arith.constant 0 : index
    %68 = vector.load %arg3[%c0_20, %c0_21] : memref<64x64xbf16, #tpu.memory_space<vmem>>, vector<64x64xbf16>
    %cst_22 = arith.constant dense<0.000000e+00> : vector<8x64xf32>
    %69 = tpu.matmul %67, %68, %cst_22 {dimension_numbers = #tpu.dot_dimension_numbers<[1], [0], [0], [1], [0, 0, 1, 1], [], []>} : vector<8x64xbf16>, vector<64x64xbf16>, vector<8x64xf32> -> vector<8x64xf32>
    %c0_23 = arith.constant 0 : index
    %c0_24 = arith.constant 0 : index
    %70 = vector.load %arg7[%c0_23, %c0_24] : memref<8x64xf32, #tpu.memory_space<vmem>>, vector<8x64xf32>
    tpu.vector_store %arg7[%c0_23, %c0_24], %69 {strides = array<i32>} : memref<8x64xf32, #tpu.memory_space<vmem>>, vector<8x64xf32>,
    return
  }
  func.func @transform_0(%arg0: i32) -> (i32, i32) {
    %c0_i32 = arith.constant 0 : i32
    %c0_i32_0 = arith.constant 0 : i32
    return %arg0, %c0_i32 : i32, i32
  }
  func.func @transform_1(%arg0: i32) -> (i32, i32) {
    %c0_i32 = arith.constant 0 : i32
    %c0_i32_0 = arith.constant 0 : i32
    %c0_i32_1 = arith.constant 0 : i32
    return %c0_i32, %c0_i32_0 : i32, i32
  }
  func.func @transform_2(%arg0: i32) -> (i32, i32) {
    %c0_i32 = arith.constant 0 : i32
    %c0_i32_0 = arith.constant 0 : i32
    %c0_i32_1 = arith.constant 0 : i32
    return %c0_i32, %c0_i32_0 : i32, i32
  }
  func.func @transform_3(%arg0: i32) -> (i32, i32) {
    %c0_i32 = arith.constant 0 : i32
    %c0_i32_0 = arith.constant 0 : i32
    %c0_i32_1 = arith.constant 0 : i32
    return %c0_i32, %c0_i32_0 : i32, i32
  }
  func.func @transform_4(%arg0: i32) -> (i32, i32) {
    %c0_i32 = arith.constant 0 : i32
    %c0_i32_0 = arith.constant 0 : i32
    %c0_i32_1 = arith.constant 0 : i32
    return %c0_i32, %c0_i32_0 : i32, i32
  }
  func.func @transform_5(%arg0: i32) -> (i32, i32) {
    %c0_i32 = arith.constant 0 : i32
    %c0_i32_0 = arith.constant 0 : i32
    %c0_i32_1 = arith.constant 0 : i32
    return %c0_i32, %c0_i32_0 : i32, i32
  }
  func.func @transform_6(%arg0: i32) -> (i32, i32) {
    %c0_i32 = arith.constant 0 : i32
    %c0_i32_0 = arith.constant 0 : i32
    return %arg0, %c0_i32 : i32, i32
  }
}

</mosaic_0001>

<llo_original>
// kernel: tpu_custom_call.1
$region0: #{tpu_custom_call.1}
  #allocation0 [shape = 'u32[]', space=smem, size = 0x4, offset = 0x4, fixed_abs, tag = 'smem constant byte address 0x4 - core index']
  #allocation1 [shape = 'u32[144,128]{1,0:T(1,128)}', space=vmem, size = 0x12000, scoped, tag = 'internal scratch']
  %s0 = inlined_call_operand.hbm [shape: bf16[16,64], index: 0, kind: input, shape index: {}]
  %s1 = inlined_call_operand.hbm [shape: bf16[64,192], index: 1, kind: input, shape index: {}]
  %s2 = inlined_call_operand.hbm [shape: bf16[64,64], index: 2, kind: input, shape index: {}]
  %s3 = inlined_call_operand.hbm [shape: f32[8,64], index: 3, kind: input, shape index: {}]
  %s4 = inlined_call_operand.hbm [shape: f32[8,64], index: 4, kind: input, shape index: {}]
  %s5 = inlined_call_operand.hbm [shape: f32[8,8], index: 5, kind: input, shape index: {}]
  %s6 = inlined_call_operand.hbm [shape: f32[16,64], index: 6, kind: output, shape index: {}]
  %s7 = sld [smem:[#allocation0]]
  $region81: #{tpu_custom_call.1} parent=0
    _
  %s9 = ssub.s32 1, %s7
  %s10 = scalar_select 0, %s9, %s7
  $region1: #{tpu_custom_call.1} parent=0
    #allocation2 [shape = 'u8[4096]{0}', space=vmem, size = 0x1000, scoped, tag = 'input window, operand 0']
    #allocation3 [shape = 's32[2]{0}', space=sflag, size = 0x8, scoped, tag = 'scoped memory for tpu_custom_call.1']
    #allocation4 [shape = 's32[2]{0}', space=sflag, size = 0x8, scoped, tag = 'scoped memory for tpu_custom_call.1']
    #allocation5 [shape = 'u8[32768]{0}', space=vmem, size = 0x8000, scoped, tag = 'input window, operand 1, single buffered']
    #allocation6 [shape = 's32[1]{0}', space=sflag, size = 0x4, scoped, tag = 'scoped memory for tpu_custom_call.1']
    #allocation7 [shape = 'u8[16384]{0}', space=vmem, size = 0x4000, scoped, tag = 'input window, operand 2, single buffered']
    #allocation8 [shape = 'u8[4096]{0}', space=vmem, size = 0x1000, scoped, tag = 'input window, operand 3, single buffered']
    #allocation9 [shape = 's32[1]{0}', space=sflag, size = 0x4, scoped, tag = 'scoped memory for tpu_custom_call.1']
    #allocation10 [shape = 'u8[4096]{0}', space=vmem, size = 0x1000, scoped, tag = 'input window, operand 4, single buffered']
    #allocation11 [shape = 'u8[4096]{0}', space=vmem, size = 0x1000, scoped, tag = 'input window, operand 5, single buffered']
    #allocation12 [shape = 's32[1]{0}', space=sflag, size = 0x4, scoped, tag = 'scoped memory for tpu_custom_call.1']
    #allocation13 [shape = 'u8[8192]{0}', space=vmem, size = 0x2000, scoped, tag = 'output window, operand 0']
    %11 = vsyncpa [#allocation3], 0
    %s12 = scalar_lea.sflag [#allocation3], 1
    %13 = vsyncpa %s12, 0
    %14 = vsyncpa [#allocation6], 0
    %15 = vsyncpa [#allocation9], 0
    %16 = vsyncpa [#allocation12], 0
    %17 = vsyncpa [#allocation4], 0
    %s18 = scalar_lea.sflag [#allocation4], 1
    %19 = vsyncpa %s18, 0
    loop: start=0, step=1, limit=4
    $region2: #{tpu_custom_call.1} parent=1 // loop_pre_header
      _
    $region3: #{tpu_custom_call.1} parent=1 // loop_header
      %s21 = sphi 0, %s25
      %p22 = scmp.ge.s32.totalorder %s21, 4
      %s31 = sphi 0, %s33
      %s34 = sphi 0, %s31
      %s35 = sphi 0, %s34
      %s51 = sphi 0, %s35
      %s55 = sphi 0, %s55
      %s57 = sphi 0, %s55
      %s58 = sphi 0, %s57
      %s72 = sphi 0, %s58
      %s76 = sphi 0, %s76
      %s78 = sphi 0, %s76
      %s79 = sphi 0, %s78
      %s93 = sphi 0, %s79
      %s97 = sphi 0, %s97
      %s99 = sphi 0, %s97
      %s100 = sphi 0, %s99
      %s114 = sphi 0, %s100
      %s118 = sphi 0, %s118
      %s120 = sphi 0, %s118
      %s121 = sphi 0, %s120
      %s135 = sphi 0, %s121
      %s139 = sphi 0, %s139
      %s141 = sphi 0, %s139
      %s142 = sphi 0, %s141
      %s156 = sphi 0, %s142
      %s162 = sphi 0, %s164
      %s165 = sphi 0, %s162
      %s166 = sphi 0, %s165
      %s182 = sphi 0, %s166
    $region4: #{tpu_custom_call.1} parent=1 // loop_header_branch
      %24 = sbr.rel (%p22) target = $region8
    $region5: #{tpu_custom_call.1} parent=1 // loop_body
      %s26 = ssub.s32 %s21, 1
      %s27 = ssub.s32 %s21, 2
      %s28 = sadd.s32 %s21, 1
      %s29 = ssub.s32 %s21, %s28
      %p30 = scmp.eq.s32.totalorder %s29, 0
      %s32 = sadd.s32 %s31, 1
      %s33 = scalar_select %p30, %s31, %s32
      %p36 = pneg %p30
      %p37 = scmp.eq.s32.totalorder %s21, 1
      %p38 = por %p36, %p37
      %p39 = scmp.ne.s32.totalorder %s31, %s34
      %p40 = scmp.eq.s32.totalorder %s21, 0
      %p41 = por %p39, %p40
      %p42 = scmp.ne.s32.totalorder %s31, %s34
      %p43 = scmp.eq.s32.totalorder %s26, 1
      %p44 = por %p42, %p43
      %p45 = scmp.ne.s32.totalorder %s34, %s35
      %p46 = scmp.eq.s32.totalorder %s26, 0
      %p47 = por %p45, %p46
      %p48 = scmp.ne.s32.totalorder %s34, %s35
      %p49 = scmp.eq.s32.totalorder %s27, 1
      %p50 = por %p48, %p49
      %p52 = scmp.ne.s32.totalorder %s35, %s51
      %p53 = scmp.eq.s32.totalorder %s27, 0
      %p54 = por %p52, %p53
      %s56 = sadd.s32 %s55, 1
      %p59 = scmp.eq.s32.totalorder %s21, 1
      %p60 = scmp.ne.s32.totalorder %s55, %s57
      %p61 = scmp.eq.s32.totalorder %s21, 0
      %p62 = por %p60, %p61
      %p63 = scmp.ne.s32.totalorder %s55, %s57
      %p64 = scmp.eq.s32.totalorder %s26, 1
      %p65 = por %p63, %p64
      %p66 = scmp.ne.s32.totalorder %s57, %s58
      %p67 = scmp.eq.s32.totalorder %s26, 0
      %p68 = por %p66, %p67
      %p69 = scmp.ne.s32.totalorder %s57, %s58
      %p70 = scmp.eq.s32.totalorder %s27, 1
      %p71 = por %p69, %p70
      %p73 = scmp.ne.s32.totalorder %s58, %s72
      %p74 = scmp.eq.s32.totalorder %s27, 0
      %p75 = por %p73, %p74
      %s77 = sadd.s32 %s76, 1
      %p80 = scmp.eq.s32.totalorder %s21, 1
      %p81 = scmp.ne.s32.totalorder %s76, %s78
      %p82 = scmp.eq.s32.totalorder %s21, 0
      %p83 = por %p81, %p82
      %p84 = scmp.ne.s32.totalorder %s76, %s78
      %p85 = scmp.eq.s32.totalorder %s26, 1
      %p86 = por %p84, %p85
      %p87 = scmp.ne.s32.totalorder %s78, %s79
      %p88 = scmp.eq.s32.totalorder %s26, 0
      %p89 = por %p87, %p88
      %p90 = scmp.ne.s32.totalorder %s78, %s79
      %p91 = scmp.eq.s32.totalorder %s27, 1
      %p92 = por %p90, %p91
      %p94 = scmp.ne.s32.totalorder %s79, %s93
      %p95 = scmp.eq.s32.totalorder %s27, 0
      %p96 = por %p94, %p95
      %s98 = sadd.s32 %s97, 1
      %p101 = scmp.eq.s32.totalorder %s21, 1
      %p102 = scmp.ne.s32.totalorder %s97, %s99
      %p103 = scmp.eq.s32.totalorder %s21, 0
      %p104 = por %p102, %p103
      %p105 = scmp.ne.s32.totalorder %s97, %s99
      %p106 = scmp.eq.s32.totalorder %s26, 1
      %p107 = por %p105, %p106
      %p108 = scmp.ne.s32.totalorder %s99, %s100
      %p109 = scmp.eq.s32.totalorder %s26, 0
      %p110 = por %p108, %p109
      %p111 = scmp.ne.s32.totalorder %s99, %s100
      %p112 = scmp.eq.s32.totalorder %s27, 1
      %p113 = por %p111, %p112
      %p115 = scmp.ne.s32.totalorder %s100, %s114
      %p116 = scmp.eq.s32.totalorder %s27, 0
      %p117 = por %p115, %p116
      %s119 = sadd.s32 %s118, 1
      %p122 = scmp.eq.s32.totalorder %s21, 1
      %p123 = scmp.ne.s32.totalorder %s118, %s120
      %p124 = scmp.eq.s32.totalorder %s21, 0
      %p125 = por %p123, %p124
      %p126 = scmp.ne.s32.totalorder %s118, %s120
      %p127 = scmp.eq.s32.totalorder %s26, 1
      %p128 = por %p126, %p127
      %p129 = scmp.ne.s32.totalorder %s120, %s121
      %p130 = scmp.eq.s32.totalorder %s26, 0
      %p131 = por %p129, %p130
      %p132 = scmp.ne.s32.totalorder %s120, %s121
      %p133 = scmp.eq.s32.totalorder %s27, 1
      %p134 = por %p132, %p133
      %p136 = scmp.ne.s32.totalorder %s121, %s135
      %p137 = scmp.eq.s32.totalorder %s27, 0
      %p138 = por %p136, %p137
      %s140 = sadd.s32 %s139, 1
      %p143 = scmp.eq.s32.totalorder %s21, 1
      %p144 = scmp.ne.s32.totalorder %s139, %s141
      %p145 = scmp.eq.s32.totalorder %s21, 0
      %p146 = por %p144, %p145
      %p147 = scmp.ne.s32.totalorder %s139, %s141
      %p148 = scmp.eq.s32.totalorder %s26, 1
      %p149 = por %p147, %p148
      %p150 = scmp.ne.s32.totalorder %s141, %s142
      %p151 = scmp.eq.s32.totalorder %s26, 0
      %p152 = por %p150, %p151
      %p153 = scmp.ne.s32.totalorder %s141, %s142
      %p154 = scmp.eq.s32.totalorder %s27, 1
      %p155 = por %p153, %p154
      %p157 = scmp.ne.s32.totalorder %s142, %s156
      %p158 = scmp.eq.s32.totalorder %s27, 0
      %p159 = por %p157, %p158
      %s160 = ssub.s32 %s21, %s28
      %p161 = scmp.eq.s32.totalorder %s160, 0
      %s163 = sadd.s32 %s162, 1
      %s164 = scalar_select %p161, %s162, %s163
      %p167 = pneg %p161
      %p168 = scmp.eq.s32.totalorder %s21, 1
      %p169 = por %p167, %p168
      %p170 = scmp.ne.s32.totalorder %s162, %s165
      %p171 = scmp.eq.s32.totalorder %s21, 0
      %p172 = por %p170, %p171
      %p173 = scmp.ne.s32.totalorder %s162, %s165
      %p174 = scmp.eq.s32.totalorder %s26, 1
      %p175 = por %p173, %p174
      %p176 = scmp.ne.s32.totalorder %s165, %s166
      %p177 = scmp.eq.s32.totalorder %s26, 0
      %p178 = por %p176, %p177
      %p179 = scmp.ne.s32.totalorder %s165, %s166
      %p180 = scmp.eq.s32.totalorder %s27, 1
      %p181 = por %p179, %p180
      %p183 = scmp.ne.s32.totalorder %s166, %s182
      %p184 = scmp.eq.s32.totalorder %s27, 0
      %p185 = por %p183, %p184
      %p186 = scmp.le.s32.totalorder 1, %s21
      %p187 = scmp.lt.s32.totalorder %s21, 3
      %p188 = pnand %p186, %p187
      %p189 = pneg %p188
      // Predicated region
      $region9: #{tpu_custom_call.1} parent=5 // pred_check
        _
      $region10: #{tpu_custom_call.1} parent=5 // pred_check_branch
        %191 = sbr.rel (%p188) target = $region12
      $region11: #{tpu_custom_call.1} parent=5 // pred_region
        %s192 = ssub.s32 %s21, 1
        // Predicated region
        $region13: #{tpu_custom_call.1} parent=11 // pred_check
          %p193 = pneg %p68
        $region14: #{tpu_custom_call.1} parent=11 // pred_check_branch
          %195 = sbr.rel (%p193) target = $region16
        $region15: #{tpu_custom_call.1} parent=11 // pred_region
          %s197 = ssub.s32 1024, 1024
          %198 = vsyncadd [#allocation6], %s197
          %s199 = sshll.u32 [#allocation5], 4
          %s200 = int_to_ptr.vmem [resolvable:$true] %s199
          %205 = dma.hbm_to_vmem [thread:$0]  %s1, 1024, %s200, [#allocation6], 128, 128, 8
        $region16: #{tpu_custom_call.1} parent=11 // pred_fallthru
          _
        // Predicated region
        $region17: #{tpu_custom_call.1} parent=11 // pred_check
          %p206 = pneg %p89
        $region18: #{tpu_custom_call.1} parent=11 // pred_check_branch
          %208 = sbr.rel (%p206) target = $region20
        $region19: #{tpu_custom_call.1} parent=11 // pred_region
          %s210 = ssub.s32 512, 512
          %211 = vsyncadd [#allocation6], %s210
          %s212 = sshll.u32 [#allocation7], 4
          %s213 = int_to_ptr.vmem [resolvable:$true] %s212
          %218 = dma.hbm_to_vmem [thread:$0]  %s2, 512, %s213, [#allocation6], 64, 64, 4
        $region20: #{tpu_custom_call.1} parent=11 // pred_fallthru
          _
        // Predicated region
        $region21: #{tpu_custom_call.1} parent=11 // pred_check
          %p219 = pneg %p110
        $region22: #{tpu_custom_call.1} parent=11 // pred_check_branch
          %221 = sbr.rel (%p219) target = $region24
        $region23: #{tpu_custom_call.1} parent=11 // pred_region
          %s223 = ssub.s32 128, 128
          %224 = vsyncadd [#allocation9], %s223
          %s226 = sshll.u32 [#allocation8], 4
          %s227 = int_to_ptr.vmem [resolvable:$true] %s226
          %229 = dma.hbm_to_vmem [thread:$0]  %s3, 128, %s227, [#allocation9]
        $region24: #{tpu_custom_call.1} parent=11 // pred_fallthru
          _
        // Predicated region
        $region25: #{tpu_custom_call.1} parent=11 // pred_check
          %p230 = pneg %p131
        $region26: #{tpu_custom_call.1} parent=11 // pred_check_branch
          %232 = sbr.rel (%p230) target = $region28
        $region27: #{tpu_custom_call.1} parent=11 // pred_region
          %s234 = ssub.s32 128, 128
          %235 = vsyncadd [#allocation9], %s234
          %s237 = sshll.u32 [#allocation10], 4
          %s238 = int_to_ptr.vmem [resolvable:$true] %s237
          %240 = dma.hbm_to_vmem [thread:$0]  %s4, 128, %s238, [#allocation9]
        $region28: #{tpu_custom_call.1} parent=11 // pred_fallthru
          _
        // Predicated region
        $region29: #{tpu_custom_call.1} parent=11 // pred_check
          %p241 = pneg %p152
        $region30: #{tpu_custom_call.1} parent=11 // pred_check_branch
          %243 = sbr.rel (%p241) target = $region32
        $region31: #{tpu_custom_call.1} parent=11 // pred_region
          %s245 = ssub.s32 128, 128
          %246 = vsyncadd [#allocation12], %s245
          %s248 = sshll.u32 [#allocation11], 4
          %s249 = int_to_ptr.vmem [resolvable:$true] %s248
          %251 = dma.hbm_to_vmem [thread:$0]  %s5, 128, %s249, [#allocation12]
        $region32: #{tpu_custom_call.1} parent=11 // pred_fallthru
          _
      $region12: #{tpu_custom_call.1} parent=5 // pred_fallthru
        _
      %p252 = scmp.lt.s32.totalorder %s21, 2
      // Predicated region
      $region33: #{tpu_custom_call.1} parent=5 // pred_check
        %p253 = pneg %p252
      $region34: #{tpu_custom_call.1} parent=5 // pred_check_branch
        %255 = sbr.rel (%p253) target = $region36
      $region35: #{tpu_custom_call.1} parent=5 // pred_region
        // Predicated region
        $region37: #{tpu_custom_call.1} parent=35 // pred_check
          %p256 = pneg %p41
        $region38: #{tpu_custom_call.1} parent=35 // pred_check_branch
          %258 = sbr.rel (%p256) target = $region40
        $region39: #{tpu_custom_call.1} parent=35 // pred_region
          %s259 = sand.u32 %s31, 1
          %s260 = scalar_lea.sflag [#allocation3], %s259
          %s261 = sand.u32 %s31, 1
          %s262 = smul.addr %s261, 4
          %s263 = scalar_lea.vmem [#allocation2], %s262
          %s265 = ssub.s32 64, 64
          %266 = vsyncadd %s260, %s265
          %s267 = smul.addr %s21, 64
          %s268 = scalar_lea.hbm %s0, %s267
          %s270 = sshll.u32 %s263, 4
          %s271 = int_to_ptr.vmem [resolvable:$true] %s270
          %273 = dma.hbm_to_vmem [thread:$0]  %s268, 64, %s271, %s260
        $region40: #{tpu_custom_call.1} parent=35 // pred_fallthru
          _
      $region36: #{tpu_custom_call.1} parent=5 // pred_fallthru
        _
      %p274 = scmp.le.s32.totalorder 1, %s21
      %p275 = scmp.lt.s32.totalorder %s21, 3
      %p276 = pnand %p274, %p275
      %p277 = pneg %p276
      // Predicated region
      $region41: #{tpu_custom_call.1} parent=5 // pred_check
        _
      $region42: #{tpu_custom_call.1} parent=5 // pred_check_branch
        %279 = sbr.rel (%p276) target = $region44
      $region43: #{tpu_custom_call.1} parent=5 // pred_region
        %s280 = ssub.s32 %s21, 1
        %s281 = sand.u32 %s34, 1
        %s282 = scalar_lea.sflag [#allocation3], %s281
        %s283 = sand.u32 %s34, 1
        %s284 = smul.addr %s283, 4
        %s285 = scalar_lea.vmem [#allocation2], %s284
        // Predicated region
        $region45: #{tpu_custom_call.1} parent=43 // pred_check
          %p286 = pneg %p47
        $region46: #{tpu_custom_call.1} parent=43 // pred_check_branch
          %288 = sbr.rel (%p286) target = $region48
        $region47: #{tpu_custom_call.1} parent=43 // pred_region
          %289 = dma.done %s282, 64
        $region48: #{tpu_custom_call.1} parent=43 // pred_fallthru
          _
        // Predicated region
        $region49: #{tpu_custom_call.1} parent=43 // pred_check
          %p290 = pneg %p68
        $region50: #{tpu_custom_call.1} parent=43 // pred_check_branch
          %292 = sbr.rel (%p290) target = $region52
        $region51: #{tpu_custom_call.1} parent=43 // pred_region
          %293 = dma.done [#allocation6], 1024
        $region52: #{tpu_custom_call.1} parent=43 // pred_fallthru
          _
        // Predicated region
        $region53: #{tpu_custom_call.1} parent=43 // pred_check
          %p294 = pneg %p89
        $region54: #{tpu_custom_call.1} parent=43 // pred_check_branch
          %296 = sbr.rel (%p294) target = $region56
        $region55: #{tpu_custom_call.1} parent=43 // pred_region
          %297 = dma.done [#allocation6], 512
        $region56: #{tpu_custom_call.1} parent=43 // pred_fallthru
          _
        // Predicated region
        $region57: #{tpu_custom_call.1} parent=43 // pred_check
          %p298 = pneg %p110
        $region58: #{tpu_custom_call.1} parent=43 // pred_check_branch
          %300 = sbr.rel (%p298) target = $region60
        $region59: #{tpu_custom_call.1} parent=43 // pred_region
          %301 = dma.done [#allocation9], 128
        $region60: #{tpu_custom_call.1} parent=43 // pred_fallthru
          _
        // Predicated region
        $region61: #{tpu_custom_call.1} parent=43 // pred_check
          %p302 = pneg %p131
        $region62: #{tpu_custom_call.1} parent=43 // pred_check_branch
          %304 = sbr.rel (%p302) target = $region64
        $region63: #{tpu_custom_call.1} parent=43 // pred_region
          %305 = dma.done [#allocation9], 128
        $region64: #{tpu_custom_call.1} parent=43 // pred_fallthru
          _
        // Predicated region
        $region65: #{tpu_custom_call.1} parent=43 // pred_check
          %p306 = pneg %p152
        $region66: #{tpu_custom_call.1} parent=43 // pred_check_branch
          %308 = sbr.rel (%p306) target = $region68
        $region67: #{tpu_custom_call.1} parent=43 // pred_region
          %309 = dma.done [#allocation12], 128
        $region68: #{tpu_custom_call.1} parent=43 // pred_fallthru
          _
        %s310 = sand.u32 %s34, 1
        %s311 = scalar_lea.sflag [#allocation3], %s310
        %s312 = sand.u32 %s34, 1
        %s313 = smul.addr %s312, 4
        %s314 = scalar_lea.vmem [#allocation2], %s313
        %p315 = pneg %p47
        %p316 = pneg %p44
        %p317 = pneg %p68
        %p318 = pneg %p65
        %p319 = pneg %p89
        %p320 = pneg %p86
        %p321 = pneg %p110
        %p322 = pneg %p107
        %p323 = pneg %p131
        %p324 = pneg %p128
        %p325 = pneg %p152
        %p326 = pneg %p149
        %p327 = pneg %p178
        %p328 = pneg %p175
        %s329 = sand.u32 %s165, 1
        %s330 = scalar_lea.sflag [#allocation4], %s329
        %s331 = sand.u32 %s165, 1
        %s332 = smul.addr %s331, 8
        %s333 = scalar_lea.vmem [#allocation13], %s332
        %v335 = vld [vmem:[%s285] sm:$0xf]
        %v336 = vld [vmem:[#allocation5] sm:$0xff]
        %v337 = vld [vmem:[#allocation5 + $0x8] sm:$0xff]
        %v338 = vld [vmem:[#allocation5 + $0x10] sm:$0xff]
        %v339 = vld [vmem:[#allocation5 + $0x18] sm:$0xff]
        %v340 = vld [vmem:[#allocation5 + $0x20] sm:$0xff]
        %v341 = vld [vmem:[#allocation5 + $0x28] sm:$0xff]
        %v342 = vld [vmem:[#allocation5 + $0x30] sm:$0xff]
        %v343 = vld [vmem:[#allocation5 + $0x38] sm:$0xff]
        %v352 = vunpack.c.l.b16 %v336
        %v353 = vunpack.c.h.b16 %v336
        %v354 = vunpack.c.l.b16 %v337
        %v355 = vunpack.c.h.b16 %v337
        %v356 = vunpack.c.l.b16 %v338
        %v357 = vunpack.c.h.b16 %v338
        %v358 = vunpack.c.l.b16 %v339
        %v359 = vunpack.c.h.b16 %v339
        %v360 = vunpack.c.l.b16 %v340
        %v361 = vunpack.c.h.b16 %v340
        %v362 = vunpack.c.l.b16 %v341
        %v363 = vunpack.c.h.b16 %v341
        %v364 = vunpack.c.l.b16 %v342
        %v365 = vunpack.c.h.b16 %v342
        %v366 = vunpack.c.l.b16 %v343
        %v367 = vunpack.c.h.b16 %v343
        %v368 = vpack.c.b16 %v354, %v352
        %v369 = vpack.c.b16 %v355, %v353
        %v370 = vpack.c.b16 %v358, %v356
        %v371 = vpack.c.b16 %v359, %v357
        %v372 = vpack.c.b16 %v362, %v360
        %v373 = vpack.c.b16 %v363, %v361
        %v374 = vpack.c.b16 %v366, %v364
        %v375 = vpack.c.b16 %v367, %v365
        %vm384 = vcmask 523264
        %v386 = vsel %vm384, %v335, 0
        %388 = vmatprep.subr.bf16.mxu0 %v369
        %389 = vmatpush1.bf16.msra.mxu0 %v368
        %390 = vmatprep.subr.bf16.mxu0 %v371
        %391 = vmatpush1.bf16.msra.mxu0 %v370
        %392 = vmatprep.subr.bf16.mxu0 %v373
        %393 = vmatpush1.bf16.msra.mxu0 %v372
        %394 = vmatprep.subr.bf16.mxu0 %v375
        %395 = vmatpush1.bf16.msra.mxu0 %v374
        %396 = vmatprep.subr.bf16.mxu0 0
        %397 = vmatpush1.bf16.msra.mxu0 0
        %398 = vmatprep.subr.bf16.mxu0 0
        %399 = vmatpush1.bf16.msra.mxu0 0
        %400 = vmatprep.subr.bf16.mxu0 0
        %401 = vmatpush1.bf16.msra.mxu0 0
        %402 = vmatprep.subr.bf16.mxu0 0
        %403 = vmatpush1.bf16.msra.mxu0 0
        %404 = vmatprep.subr.bf16.mxu0 0
        %405 = vmatpush1.bf16.msra.mxu0 0
        %406 = vmatprep.subr.bf16.mxu0 0
        %407 = vmatpush1.bf16.msra.mxu0 0
        %408 = vmatprep.subr.bf16.mxu0 0
        %409 = vmatpush1.bf16.msra.mxu0 0
        %410 = vmatprep.subr.bf16.mxu0 0
        %411 = vmatpush1.bf16.msra.mxu0 0
        %412 = vmatprep.subr.bf16.mxu0 0
        %413 = vmatpush1.bf16.msra.mxu0 0
        %414 = vmatprep.subr.bf16.mxu0 0
        %415 = vmatpush1.bf16.msra.mxu0 0
        %416 = vmatprep.subr.bf16.mxu0 0
        %417 = vmatpush1.bf16.msra.mxu0 0
        %418 = vmatprep.subr.bf16.mxu0 0
        %419 = vmatpush1.bf16.msra.mxu0 0
        %420 = vmatprep.mubr.bf16.mxu0 0
        %421 = vmatmul.mubr.bf16.gmra.mrb[0].mxu0 %v386
        %v422 = vpop.f32.mrb[0].mxu0
        %v423 = vadd.f32 0.0, %v422
        %v424 = vpop.f32.mrb[0].mxu0
        %v425 = vadd.f32 0.0, %v424
        %v426 = vpop.f32.mrb[0].mxu0
        %v427 = vpop.f32.mrb[0].mxu0
        %428 = vdwg.mxu0
        %v429 = vlaneseq
        %v430 = vand.u32 %v429, 127
        %vm431 = vcmp.lt.s32.totalorder %v430, 0
        %v432 = vsub.s32 0, %v430
        %v433 = vsel %vm431, %v432, %v430
        %v434 = vshrl.u32 %v433, 1
        %v435 = vand.u32 %v433, 1
        %v436 = vsub.s32 0, %v435
        %v437 = vsel %vm431, %v436, %v435
        %vm438 = vcmp.ne.s32.totalorder %v437, 0
        %vm439 = vcmp.lt.s32.totalorder %v437, 0
        %vm440 = vmand %vm439, %vm438
        %v441 = vadd.s32 %v437, 2
        %v442 = vsel %vm440, %v441, %v437
        %vm443 = vcmp.eq.s32.totalorder %v442, 0
        %v444 = vld [vmem:[#allocation8] sm:$0xff]
        %v445 = vld [vmem:[#allocation10] sm:$0xff]
        %v446 = vmul.f32 %v423, %v444
        %vm447 = vcmask 1048064
        %448 = vrot.lane.b32.xlu0 %v423, 64
        %v449 = vpop.permute.xlu0 %448
        %v450 = vsel %vm447, %v449, %v423
        %451 = vrot.lane.b32.xlu0 %v450, 64
        %v452 = vpop.permute.xlu0 %451
        %v453 = vsel %vm447, %v452, %v423
        %455 = vrot.lane.b32.xlu0 %v453, 127
        %v456 = vpop.permute.xlu0 %455
        %458 = vrot.lane.b32.xlu0 %v453, 65
        %v459 = vpop.permute.xlu0 %458
        %v461 = vsel %vm443, %v456, %v459
        %v462 = vmul.f32 %v461, %v445
        %v463 = vadd.f32 %v446, %v462
        %465 = vrot.lane.b32.xlu0 %v444, 64
        %v466 = vpop.permute.xlu0 %465
        %v468 = vmul.f32 %v423, %v466
        %470 = vrot.lane.b32.xlu0 %v423, 64
        %v471 = vpop.permute.xlu0 %470
        %473 = vrot.lane.b32.xlu0 %v471, 64
        %v474 = vpop.permute.xlu0 %473
        %v475 = vsel %vm447, %v474, %v471
        %476 = vrot.lane.b32.xlu0 %v475, 64
        %v477 = vpop.permute.xlu0 %476
        %v478 = vsel %vm447, %v477, %v471
        %480 = vrot.lane.b32.xlu0 %v478, 127
        %v481 = vpop.permute.xlu0 %480
        %483 = vrot.lane.b32.xlu0 %v478, 65
        %v484 = vpop.permute.xlu0 %483
        %v486 = vsel %vm443, %v481, %v484
        %v487 = vmul.f32 %v486, %v445
        %489 = vrot.lane.b32.xlu0 %v487, 64
        %v490 = vpop.permute.xlu0 %489
        %v492 = vadd.f32 %v468, %v490
        %494 = vrot.lane.b32.xlu0 %v463, 112
        %v495 = vpop.permute.xlu0 %494
        %497 = vrot.lane.b32.xlu0 %v463, 96
        %v498 = vpop.permute.xlu0 %497
        %500 = vrot.lane.b32.xlu0 %v463, 80
        %v501 = vpop.permute.xlu0 %500
        %v503 = vcombine.low %v463, %v498
        %v504 = vcombine.high %v463, %v498
        %v506 = vunpack.c.l.s4 1983009808
        %v507 = vunpack.c.0.s8 %v506
        %v508 = vlaneseq
        %v509 = vshrl.u32 %v508, 7
        %v510 = vsub.s32 %v507, %v509
        %v511 = vrot.slane %v503, %v510
        %v513 = vunpack.c.l.s4 1983009808
        %v514 = vunpack.c.0.s8 %v513
        %v515 = vlaneseq
        %v516 = vshrl.u32 %v515, 7
        %v517 = vsub.s32 %v514, %v516
        %v518 = vrot.slane %v504, %v517
        %v519 = vcombine.low %v495, %v501
        %v520 = vcombine.high %v495, %v501
        %v522 = vunpack.c.l.s4 1983009808
        %v523 = vunpack.c.0.s8 %v522
        %v524 = vlaneseq
        %v525 = vshrl.u32 %v524, 7
        %v526 = vsub.s32 %v523, %v525
        %v527 = vrot.slane %v519, %v526
        %v529 = vunpack.c.l.s4 1983009808
        %v530 = vunpack.c.0.s8 %v529
        %v531 = vlaneseq
        %v532 = vshrl.u32 %v531, 7
        %v533 = vsub.s32 %v530, %v532
        %v534 = vrot.slane %v520, %v533
        %v535 = vcombine.low %v511, %v527
        %v536 = vcombine.high %v511, %v527
        %v538 = vunpack.c.l.s4 1934713408
        %v539 = vunpack.c.0.s8 %v538
        %v540 = vlaneseq
        %v541 = vshrl.u32 %v540, 7
        %v542 = vsub.s32 %v539, %v541
        %v543 = vrot.slane %v535, %v542
        %v545 = vunpack.c.l.s4 1934713408
        %v546 = vunpack.c.0.s8 %v545
        %v547 = vlaneseq
        %v548 = vshrl.u32 %v547, 7
        %v549 = vsub.s32 %v546, %v548
        %v550 = vrot.slane %v536, %v549
        %v551 = vcombine.low %v518, %v534
        %v552 = vcombine.high %v518, %v534
        %v554 = vunpack.c.l.s4 1934713408
        %v555 = vunpack.c.0.s8 %v554
        %v556 = vlaneseq
        %v557 = vshrl.u32 %v556, 7
        %v558 = vsub.s32 %v555, %v557
        %v559 = vrot.slane %v551, %v558
        %v561 = vunpack.c.l.s4 1934713408
        %v562 = vunpack.c.0.s8 %v561
        %v563 = vlaneseq
        %v564 = vshrl.u32 %v563, 7
        %v565 = vsub.s32 %v562, %v564
        %v566 = vrot.slane %v552, %v565
        %v567 = vcombine.high %v543, 0.0
        %v568 = vcombine.high %v550, 0.0
        %v569 = vcombine.high %v559, 0.0
        %v570 = vcombine.high %v566, 0.0
        %v571 = vcombine.low %v543, %v550
        %v573 = vunpack.c.l.s4 1983009808
        %v574 = vunpack.c.0.s8 %v573
        %v575 = vlaneseq
        %v576 = vshrl.u32 %v575, 7
        %v577 = vsub.s32 %v574, %v576
        %v578 = vrot.slane %v571, %v577
        %v579 = vcombine.low %v567, %v568
        %v581 = vunpack.c.l.s4 1983009808
        %v582 = vunpack.c.0.s8 %v581
        %v583 = vlaneseq
        %v584 = vshrl.u32 %v583, 7
        %v585 = vsub.s32 %v582, %v584
        %v586 = vrot.slane %v579, %v585
        %v587 = vcombine.low %v559, %v566
        %v589 = vunpack.c.l.s4 1983009808
        %v590 = vunpack.c.0.s8 %v589
        %v591 = vlaneseq
        %v592 = vshrl.u32 %v591, 7
        %v593 = vsub.s32 %v590, %v592
        %v594 = vrot.slane %v587, %v593
        %v595 = vcombine.low %v569, %v570
        %v597 = vunpack.c.l.s4 1983009808
        %v598 = vunpack.c.0.s8 %v597
        %v599 = vlaneseq
        %v600 = vshrl.u32 %v599, 7
        %v601 = vsub.s32 %v598, %v600
        %v602 = vrot.slane %v595, %v601
        %v603 = vcombine.low %v578, %v586
        %v604 = vcombine.high %v578, %v586
        %v606 = vunpack.c.l.s4 1934713408
        %v607 = vunpack.c.0.s8 %v606
        %v608 = vlaneseq
        %v609 = vshrl.u32 %v608, 7
        %v610 = vsub.s32 %v607, %v609
        %v611 = vrot.slane %v603, %v610
        %v613 = vunpack.c.l.s4 1934713408
        %v614 = vunpack.c.0.s8 %v613
        %v615 = vlaneseq
        %v616 = vshrl.u32 %v615, 7
        %v617 = vsub.s32 %v614, %v616
        %v618 = vrot.slane %v604, %v617
        %v619 = vcombine.low %v594, %v602
        %v620 = vcombine.high %v594, %v602
        %v622 = vunpack.c.l.s4 1934713408
        %v623 = vunpack.c.0.s8 %v622
        %v624 = vlaneseq
        %v625 = vshrl.u32 %v624, 7
        %v626 = vsub.s32 %v623, %v625
        %v627 = vrot.slane %v619, %v626
        %v629 = vunpack.c.l.s4 1934713408
        %v630 = vunpack.c.0.s8 %v629
        %v631 = vlaneseq
        %v632 = vshrl.u32 %v631, 7
        %v633 = vsub.s32 %v630, %v632
        %v634 = vrot.slane %v620, %v633
        %v635 = vcombine.low %v611, %v627
        %v636 = vcombine.high %v611, %v627
        %v637 = vcombine.low %v618, %v634
        %v638 = vcombine.high %v618, %v634
        %v639 = vpack.c.bf16 %v635, %v635
        %v640 = vpack.c.bf16 %v636, %v636
        %v641 = vpack.c.bf16 %v637, %v637
        %v642 = vpack.c.bf16 %v638, %v638
        %644 = vrot.lane.b32.xlu0 %v492, 112
        %v645 = vpop.permute.xlu0 %644
        %646 = vrot.lane.b32.xlu0 %v492, 96
        %v647 = vpop.permute.xlu0 %646
        %648 = vrot.lane.b32.xlu0 %v492, 80
        %v649 = vpop.permute.xlu0 %648
        %650 = vrot.lane.b32.xlu0 %v492, 64
        %v651 = vpop.permute.xlu0 %650
        %652 = vrot.lane.b32.xlu0 %v645, 64
        %v653 = vpop.permute.xlu0 %652
        %654 = vrot.lane.b32.xlu0 %v647, 64
        %v655 = vpop.permute.xlu0 %654
        %656 = vrot.lane.b32.xlu0 %v649, 64
        %v657 = vpop.permute.xlu0 %656
        %v662 = vcombine.low %v651, %v655
        %v663 = vcombine.high %v651, %v655
        %v665 = vunpack.c.l.s4 1983009808
        %v666 = vunpack.c.0.s8 %v665
        %v667 = vlaneseq
        %v668 = vshrl.u32 %v667, 7
        %v669 = vsub.s32 %v666, %v668
        %v670 = vrot.slane %v662, %v669
        %v672 = vunpack.c.l.s4 1983009808
        %v673 = vunpack.c.0.s8 %v672
        %v674 = vlaneseq
        %v675 = vshrl.u32 %v674, 7
        %v676 = vsub.s32 %v673, %v675
        %v677 = vrot.slane %v663, %v676
        %v678 = vcombine.low %v653, %v657
        %v679 = vcombine.high %v653, %v657
        %v681 = vunpack.c.l.s4 1983009808
        %v682 = vunpack.c.0.s8 %v681
        %v683 = vlaneseq
        %v684 = vshrl.u32 %v683, 7
        %v685 = vsub.s32 %v682, %v684
        %v686 = vrot.slane %v678, %v685
        %v688 = vunpack.c.l.s4 1983009808
        %v689 = vunpack.c.0.s8 %v688
        %v690 = vlaneseq
        %v691 = vshrl.u32 %v690, 7
        %v692 = vsub.s32 %v689, %v691
        %v693 = vrot.slane %v679, %v692
        %v694 = vcombine.low %v670, %v686
        %v695 = vcombine.high %v670, %v686
        %v697 = vunpack.c.l.s4 1934713408
        %v698 = vunpack.c.0.s8 %v697
        %v699 = vlaneseq
        %v700 = vshrl.u32 %v699, 7
        %v701 = vsub.s32 %v698, %v700
        %v702 = vrot.slane %v694, %v701
        %v704 = vunpack.c.l.s4 1934713408
        %v705 = vunpack.c.0.s8 %v704
        %v706 = vlaneseq
        %v707 = vshrl.u32 %v706, 7
        %v708 = vsub.s32 %v705, %v707
        %v709 = vrot.slane %v695, %v708
        %v710 = vcombine.low %v677, %v693
        %v711 = vcombine.high %v677, %v693
        %v713 = vunpack.c.l.s4 1934713408
        %v714 = vunpack.c.0.s8 %v713
        %v715 = vlaneseq
        %v716 = vshrl.u32 %v715, 7
        %v717 = vsub.s32 %v714, %v716
        %v718 = vrot.slane %v710, %v717
        %v720 = vunpack.c.l.s4 1934713408
        %v721 = vunpack.c.0.s8 %v720
        %v722 = vlaneseq
        %v723 = vshrl.u32 %v722, 7
        %v724 = vsub.s32 %v721, %v723
        %v725 = vrot.slane %v711, %v724
        %v726 = vcombine.high %v702, 0.0
        %v727 = vcombine.high %v709, 0.0
        %v728 = vcombine.high %v718, 0.0
        %v729 = vcombine.high %v725, 0.0
        %v730 = vcombine.low %v702, %v709
        %v732 = vunpack.c.l.s4 1983009808
        %v733 = vunpack.c.0.s8 %v732
        %v734 = vlaneseq
        %v735 = vshrl.u32 %v734, 7
        %v736 = vsub.s32 %v733, %v735
        %v737 = vrot.slane %v730, %v736
        %v738 = vcombine.low %v726, %v727
        %v740 = vunpack.c.l.s4 1983009808
        %v741 = vunpack.c.0.s8 %v740
        %v742 = vlaneseq
        %v743 = vshrl.u32 %v742, 7
        %v744 = vsub.s32 %v741, %v743
        %v745 = vrot.slane %v738, %v744
        %v746 = vcombine.low %v718, %v725
        %v748 = vunpack.c.l.s4 1983009808
        %v749 = vunpack.c.0.s8 %v748
        %v750 = vlaneseq
        %v751 = vshrl.u32 %v750, 7
        %v752 = vsub.s32 %v749, %v751
        %v753 = vrot.slane %v746, %v752
        %v754 = vcombine.low %v728, %v729
        %v756 = vunpack.c.l.s4 1983009808
        %v757 = vunpack.c.0.s8 %v756
        %v758 = vlaneseq
        %v759 = vshrl.u32 %v758, 7
        %v760 = vsub.s32 %v757, %v759
        %v761 = vrot.slane %v754, %v760
        %v762 = vcombine.low %v737, %v745
        %v763 = vcombine.high %v737, %v745
        %v765 = vunpack.c.l.s4 1934713408
        %v766 = vunpack.c.0.s8 %v765
        %v767 = vlaneseq
        %v768 = vshrl.u32 %v767, 7
        %v769 = vsub.s32 %v766, %v768
        %v770 = vrot.slane %v762, %v769
        %v772 = vunpack.c.l.s4 1934713408
        %v773 = vunpack.c.0.s8 %v772
        %v774 = vlaneseq
        %v775 = vshrl.u32 %v774, 7
        %v776 = vsub.s32 %v773, %v775
        %v777 = vrot.slane %v763, %v776
        %v778 = vcombine.low %v753, %v761
        %v779 = vcombine.high %v753, %v761
        %v781 = vunpack.c.l.s4 1934713408
        %v782 = vunpack.c.0.s8 %v781
        %v783 = vlaneseq
        %v784 = vshrl.u32 %v783, 7
        %v785 = vsub.s32 %v782, %v784
        %v786 = vrot.slane %v778, %v785
        %v788 = vunpack.c.l.s4 1934713408
        %v789 = vunpack.c.0.s8 %v788
        %v790 = vlaneseq
        %v791 = vshrl.u32 %v790, 7
        %v792 = vsub.s32 %v789, %v791
        %v793 = vrot.slane %v779, %v792
        %v794 = vcombine.low %v770, %v786
        %v795 = vcombine.high %v770, %v786
        %v796 = vcombine.low %v777, %v793
        %v797 = vcombine.high %v777, %v793
        %v798 = vpack.c.bf16 %v794, %v794
        %v799 = vpack.c.bf16 %v795, %v795
        %v800 = vpack.c.bf16 %v796, %v796
        %v801 = vpack.c.bf16 %v797, %v797
        %803 = vrot.lane.b32.xlu0 %v425, 112
        %v804 = vpop.permute.xlu0 %803
        %806 = vrot.lane.b32.xlu0 %v425, 96
        %v807 = vpop.permute.xlu0 %806
        %809 = vrot.lane.b32.xlu0 %v425, 80
        %v810 = vpop.permute.xlu0 %809
        %v812 = vcombine.low %v425, %v807
        %v813 = vcombine.high %v425, %v807
        %v815 = vunpack.c.l.s4 1983009808
        %v816 = vunpack.c.0.s8 %v815
        %v817 = vlaneseq
        %v818 = vshrl.u32 %v817, 7
        %v819 = vsub.s32 %v816, %v818
        %v820 = vrot.slane %v812, %v819
        %v822 = vunpack.c.l.s4 1983009808
        %v823 = vunpack.c.0.s8 %v822
        %v824 = vlaneseq
        %v825 = vshrl.u32 %v824, 7
        %v826 = vsub.s32 %v823, %v825
        %v827 = vrot.slane %v813, %v826
        %v828 = vcombine.low %v804, %v810
        %v829 = vcombine.high %v804, %v810
        %v831 = vunpack.c.l.s4 1983009808
        %v832 = vunpack.c.0.s8 %v831
        %v833 = vlaneseq
        %v834 = vshrl.u32 %v833, 7
        %v835 = vsub.s32 %v832, %v834
        %v836 = vrot.slane %v828, %v835
        %v838 = vunpack.c.l.s4 1983009808
        %v839 = vunpack.c.0.s8 %v838
        %v840 = vlaneseq
        %v841 = vshrl.u32 %v840, 7
        %v842 = vsub.s32 %v839, %v841
        %v843 = vrot.slane %v829, %v842
        %v844 = vcombine.low %v820, %v836
        %v845 = vcombine.high %v820, %v836
        %v847 = vunpack.c.l.s4 1934713408
        %v848 = vunpack.c.0.s8 %v847
        %v849 = vlaneseq
        %v850 = vshrl.u32 %v849, 7
        %v851 = vsub.s32 %v848, %v850
        %v852 = vrot.slane %v844, %v851
        %v854 = vunpack.c.l.s4 1934713408
        %v855 = vunpack.c.0.s8 %v854
        %v856 = vlaneseq
        %v857 = vshrl.u32 %v856, 7
        %v858 = vsub.s32 %v855, %v857
        %v859 = vrot.slane %v845, %v858
        %v860 = vcombine.low %v827, %v843
        %v861 = vcombine.high %v827, %v843
        %v863 = vunpack.c.l.s4 1934713408
        %v864 = vunpack.c.0.s8 %v863
        %v865 = vlaneseq
        %v866 = vshrl.u32 %v865, 7
        %v867 = vsub.s32 %v864, %v866
        %v868 = vrot.slane %v860, %v867
        %v870 = vunpack.c.l.s4 1934713408
        %v871 = vunpack.c.0.s8 %v870
        %v872 = vlaneseq
        %v873 = vshrl.u32 %v872, 7
        %v874 = vsub.s32 %v871, %v873
        %v875 = vrot.slane %v861, %v874
        %v876 = vcombine.high %v852, 0.0
        %v877 = vcombine.high %v859, 0.0
        %v878 = vcombine.high %v868, 0.0
        %v879 = vcombine.high %v875, 0.0
        %v880 = vcombine.low %v852, %v859
        %v882 = vunpack.c.l.s4 1983009808
        %v883 = vunpack.c.0.s8 %v882
        %v884 = vlaneseq
        %v885 = vshrl.u32 %v884, 7
        %v886 = vsub.s32 %v883, %v885
        %v887 = vrot.slane %v880, %v886
        %v888 = vcombine.low %v876, %v877
        %v890 = vunpack.c.l.s4 1983009808
        %v891 = vunpack.c.0.s8 %v890
        %v892 = vlaneseq
        %v893 = vshrl.u32 %v892, 7
        %v894 = vsub.s32 %v891, %v893
        %v895 = vrot.slane %v888, %v894
        %v896 = vcombine.low %v868, %v875
        %v898 = vunpack.c.l.s4 1983009808
        %v899 = vunpack.c.0.s8 %v898
        %v900 = vlaneseq
        %v901 = vshrl.u32 %v900, 7
        %v902 = vsub.s32 %v899, %v901
        %v903 = vrot.slane %v896, %v902
        %v904 = vcombine.low %v878, %v879
        %v906 = vunpack.c.l.s4 1983009808
        %v907 = vunpack.c.0.s8 %v906
        %v908 = vlaneseq
        %v909 = vshrl.u32 %v908, 7
        %v910 = vsub.s32 %v907, %v909
        %v911 = vrot.slane %v904, %v910
        %v912 = vcombine.low %v887, %v895
        %v913 = vcombine.high %v887, %v895
        %v915 = vunpack.c.l.s4 1934713408
        %v916 = vunpack.c.0.s8 %v915
        %v917 = vlaneseq
        %v918 = vshrl.u32 %v917, 7
        %v919 = vsub.s32 %v916, %v918
        %v920 = vrot.slane %v912, %v919
        %v922 = vunpack.c.l.s4 1934713408
        %v923 = vunpack.c.0.s8 %v922
        %v924 = vlaneseq
        %v925 = vshrl.u32 %v924, 7
        %v926 = vsub.s32 %v923, %v925
        %v927 = vrot.slane %v913, %v926
        %v928 = vcombine.low %v903, %v911
        %v929 = vcombine.high %v903, %v911
        %v931 = vunpack.c.l.s4 1934713408
        %v932 = vunpack.c.0.s8 %v931
        %v933 = vlaneseq
        %v934 = vshrl.u32 %v933, 7
        %v935 = vsub.s32 %v932, %v934
        %v936 = vrot.slane %v928, %v935
        %v938 = vunpack.c.l.s4 1934713408
        %v939 = vunpack.c.0.s8 %v938
        %v940 = vlaneseq
        %v941 = vshrl.u32 %v940, 7
        %v942 = vsub.s32 %v939, %v941
        %v943 = vrot.slane %v929, %v942
        %v944 = vcombine.low %v920, %v936
        %v945 = vcombine.high %v920, %v936
        %v946 = vcombine.low %v927, %v943
        %v947 = vcombine.high %v927, %v943
        %v948 = vpack.c.bf16 %v944, %v944
        %v949 = vpack.c.bf16 %v945, %v945
        %v950 = vpack.c.bf16 %v946, %v946
        %v951 = vpack.c.bf16 %v947, %v947
        %v952 = vld [vmem:[#allocation11] sm:$0xff]
        %vm953 = vcmask 130048
        %v955 = vsel %vm953, %v639, 0
        %v958 = vsel %vm953, %v798, 0
        %960 = vmatprep.subr.bf16.mxu0 0
        %961 = vmatpush1.bf16.xpose.msra.mxu0 %v958
        %962 = vmatprep.subr.bf16.mxu0 0
        %963 = vmatpush1.bf16.xpose.msra.mxu0 0
        %964 = vmatprep.subr.bf16.mxu0 0
        %965 = vmatpush1.bf16.xpose.msra.mxu0 0
        %966 = vmatprep.subr.bf16.mxu0 0
        %967 = vmatpush1.bf16.xpose.msra.mxu0 0
        %968 = vmatprep.subr.bf16.mxu0 0
        %969 = vmatpush1.bf16.xpose.msra.mxu0 0
        %970 = vmatprep.subr.bf16.mxu0 0
        %971 = vmatpush1.bf16.xpose.msra.mxu0 0
        %972 = vmatprep.subr.bf16.mxu0 0
        %973 = vmatpush1.bf16.xpose.msra.mxu0 0
        %974 = vmatprep.subr.bf16.mxu0 0
        %975 = vmatpush1.bf16.xpose.msra.mxu0 0
        %976 = vmatprep.subr.bf16.mxu0 0
        %977 = vmatpush1.bf16.xpose.msra.mxu0 0
        %978 = vmatprep.subr.bf16.mxu0 0
        %979 = vmatpush1.bf16.xpose.msra.mxu0 0
        %980 = vmatprep.subr.bf16.mxu0 0
        %981 = vmatpush1.bf16.xpose.msra.mxu0 0
        %982 = vmatprep.subr.bf16.mxu0 0
        %983 = vmatpush1.bf16.xpose.msra.mxu0 0
        %984 = vmatprep.subr.bf16.mxu0 0
        %985 = vmatpush1.bf16.xpose.msra.mxu0 0
        %986 = vmatprep.subr.bf16.mxu0 0
        %987 = vmatpush1.bf16.xpose.msra.mxu0 0
        %988 = vmatprep.subr.bf16.mxu0 0
        %989 = vmatpush1.bf16.xpose.msra.mxu0 0
        %990 = vmatprep.subr.bf16.mxu0 0
        %991 = vmatpush1.bf16.xpose.msra.mxu0 0
        %992 = vmatprep.mubr.bf16.mxu0 0
        %993 = vmatmul.mubr.bf16.gmra.mrb[0].mxu0 %v955
        %v994 = vpop.f32.mrb[0].mxu0
        %v995 = vadd.f32 %v952, %v994
        %v996 = vpop.f32.mrb[0].mxu0
        %v997 = vpop.f32.mrb[0].mxu0
        %v998 = vpop.f32.mrb[0].mxu0
        %999 = vdwg.mxu0
        %v1001 = vsel %vm953, %v640, 0
        %v1004 = vsel %vm953, %v799, 0
        %1006 = vmatprep.subr.bf16.mxu0 0
        %1007 = vmatpush1.bf16.xpose.msra.mxu0 %v1004
        %1008 = vmatprep.subr.bf16.mxu0 0
        %1009 = vmatpush1.bf16.xpose.msra.mxu0 0
        %1010 = vmatprep.subr.bf16.mxu0 0
        %1011 = vmatpush1.bf16.xpose.msra.mxu0 0
        %1012 = vmatprep.subr.bf16.mxu0 0
        %1013 = vmatpush1.bf16.xpose.msra.mxu0 0
        %1014 = vmatprep.subr.bf16.mxu0 0
        %1015 = vmatpush1.bf16.xpose.msra.mxu0 0
        %1016 = vmatprep.subr.bf16.mxu0 0
        %1017 = vmatpush1.bf16.xpose.msra.mxu0 0
        %1018 = vmatprep.subr.bf16.mxu0 0
        %1019 = vmatpush1.bf16.xpose.msra.mxu0 0
        %1020 = vmatprep.subr.bf16.mxu0 0
        %1021 = vmatpush1.bf16.xpose.msra.mxu0 0
        %1022 = vmatprep.subr.bf16.mxu0 0
        %1023 = vmatpush1.bf16.xpose.msra.mxu0 0
        %1024 = vmatprep.subr.bf16.mxu0 0
        %1025 = vmatpush1.bf16.xpose.msra.mxu0 0
        %1026 = vmatprep.subr.bf16.mxu0 0
        %1027 = vmatpush1.bf16.xpose.msra.mxu0 0
        %1028 = vmatprep.subr.bf16.mxu0 0
        %1029 = vmatpush1.bf16.xpose.msra.mxu0 0
        %1030 = vmatprep.subr.bf16.mxu0 0
        %1031 = vmatpush1.bf16.xpose.msra.mxu0 0
        %1032 = vmatprep.subr.bf16.mxu0 0
        %1033 = vmatpush1.bf16.xpose.msra.mxu0 0
        %1034 = vmatprep.subr.bf16.mxu0 0
        %1035 = vmatpush1.bf16.xpose.msra.mxu0 0
        %1036 = vmatprep.subr.bf16.mxu0 0
        %1037 = vmatpush1.bf16.xpose.msra.mxu0 0
        %1038 = vmatprep.mubr.bf16.mxu0 0
        %1039 = vmatmul.mubr.bf16.gmra.mrb[0].mxu0 %v1001
        %v1040 = vpop.f32.mrb[0].mxu0
        %v1041 = vadd.f32 %v952, %v1040
        %v1042 = vpop.f32.mrb[0].mxu0
        %v1043 = vpop.f32.mrb[0].mxu0
        %v1044 = vpop.f32.mrb[0].mxu0
        %1045 = vdwg.mxu0
        %v1047 = vsel %vm953, %v641, 0
        %v1050 = vsel %vm953, %v800, 0
        %1052 = vmatprep.subr.bf16.mxu0 0
        %1053 = vmatpush1.bf16.xpose.msra.mxu0 %v1050
        %1054 = vmatprep.subr.bf16.mxu0 0
        %1055 = vmatpush1.bf16.xpose.msra.mxu0 0
        %1056 = vmatprep.subr.bf16.mxu0 0
        %1057 = vmatpush1.bf16.xpose.msra.mxu0 0
        %1058 = vmatprep.subr.bf16.mxu0 0
        %1059 = vmatpush1.bf16.xpose.msra.mxu0 0
        %1060 = vmatprep.subr.bf16.mxu0 0
        %1061 = vmatpush1.bf16.xpose.msra.mxu0 0
        %1062 = vmatprep.subr.bf16.mxu0 0
        %1063 = vmatpush1.bf16.xpose.msra.mxu0 0
        %1064 = vmatprep.subr.bf16.mxu0 0
        %1065 = vmatpush1.bf16.xpose.msra.mxu0 0
        %1066 = vmatprep.subr.bf16.mxu0 0
        %1067 = vmatpush1.bf16.xpose.msra.mxu0 0
        %1068 = vmatprep.subr.bf16.mxu0 0
        %1069 = vmatpush1.bf16.xpose.msra.mxu0 0
        %1070 = vmatprep.subr.bf16.mxu0 0
        %1071 = vmatpush1.bf16.xpose.msra.mxu0 0
        %1072 = vmatprep.subr.bf16.mxu0 0
        %1073 = vmatpush1.bf16.xpose.msra.mxu0 0
        %1074 = vmatprep.subr.bf16.mxu0 0
        %1075 = vmatpush1.bf16.xpose.msra.mxu0 0
        %1076 = vmatprep.subr.bf16.mxu0 0
        %1077 = vmatpush1.bf16.xpose.msra.mxu0 0
        %1078 = vmatprep.subr.bf16.mxu0 0
        %1079 = vmatpush1.bf16.xpose.msra.mxu0 0
        %1080 = vmatprep.subr.bf16.mxu0 0
        %1081 = vmatpush1.bf16.xpose.msra.mxu0 0
        %1082 = vmatprep.subr.bf16.mxu0 0
        %1083 = vmatpush1.bf16.xpose.msra.mxu0 0
        %1084 = vmatprep.mubr.bf16.mxu0 0
        %1085 = vmatmul.mubr.bf16.gmra.mrb[0].mxu0 %v1047
        %v1086 = vpop.f32.mrb[0].mxu0
        %v1087 = vadd.f32 %v952, %v1086
        %v1088 = vpop.f32.mrb[0].mxu0
        %v1089 = vpop.f32.mrb[0].mxu0
        %v1090 = vpop.f32.mrb[0].mxu0
        %1091 = vdwg.mxu0
        %v1093 = vsel %vm953, %v642, 0
        %v1096 = vsel %vm953, %v801, 0
        %1098 = vmatprep.subr.bf16.mxu0 0
        %1099 = vmatpush1.bf16.xpose.msra.mxu0 %v1096
        %1100 = vmatprep.subr.bf16.mxu0 0
        %1101 = vmatpush1.bf16.xpose.msra.mxu0 0
        %1102 = vmatprep.subr.bf16.mxu0 0
        %1103 = vmatpush1.bf16.xpose.msra.mxu0 0
        %1104 = vmatprep.subr.bf16.mxu0 0
        %1105 = vmatpush1.bf16.xpose.msra.mxu0 0
        %1106 = vmatprep.subr.bf16.mxu0 0
        %1107 = vmatpush1.bf16.xpose.msra.mxu0 0
        %1108 = vmatprep.subr.bf16.mxu0 0
        %1109 = vmatpush1.bf16.xpose.msra.mxu0 0
        %1110 = vmatprep.subr.bf16.mxu0 0
        %1111 = vmatpush1.bf16.xpose.msra.mxu0 0
        %1112 = vmatprep.subr.bf16.mxu0 0
        %1113 = vmatpush1.bf16.xpose.msra.mxu0 0
        %1114 = vmatprep.subr.bf16.mxu0 0
        %1115 = vmatpush1.bf16.xpose.msra.mxu0 0
        %1116 = vmatprep.subr.bf16.mxu0 0
        %1117 = vmatpush1.bf16.xpose.msra.mxu0 0
        %1118 = vmatprep.subr.bf16.mxu0 0
        %1119 = vmatpush1.bf16.xpose.msra.mxu0 0
        %1120 = vmatprep.subr.bf16.mxu0 0
        %1121 = vmatpush1.bf16.xpose.msra.mxu0 0
        %1122 = vmatprep.subr.bf16.mxu0 0
        %1123 = vmatpush1.bf16.xpose.msra.mxu0 0
        %1124 = vmatprep.subr.bf16.mxu0 0
        %1125 = vmatpush1.bf16.xpose.msra.mxu0 0
        %1126 = vmatprep.subr.bf16.mxu0 0
        %1127 = vmatpush1.bf16.xpose.msra.mxu0 0
        %1128 = vmatprep.subr.bf16.mxu0 0
        %1129 = vmatpush1.bf16.xpose.msra.mxu0 0
        %1130 = vmatprep.mubr.bf16.mxu0 0
        %1131 = vmatmul.mubr.bf16.gmra.mrb[0].mxu0 %v1093
        %v1132 = vpop.f32.mrb[0].mxu0
        %v1133 = vadd.f32 %v952, %v1132
        %v1134 = vpop.f32.mrb[0].mxu0
        %v1135 = vpop.f32.mrb[0].mxu0
        %v1136 = vpop.f32.mrb[0].mxu0
        %1137 = vdwg.mxu0
        %vm1138 = vcmask 64512
        %v1139 = vsel %vm1138, %v995, -inf
        %1140 = vmax.xlane.f32.xlu0 %v1139
        %v1141 = vpop.xlane.xlu0 %1140
        %v1142 = vsel %vm1138, %v1041, -inf
        %1143 = vmax.xlane.f32.xlu0 %v1142
        %v1144 = vpop.xlane.xlu0 %1143
        %v1145 = vsel %vm1138, %v1087, -inf
        %1146 = vmax.xlane.f32.xlu0 %v1145
        %v1147 = vpop.xlane.xlu0 %1146
        %v1148 = vsel %vm1138, %v1133, -inf
        %1149 = vmax.xlane.f32.xlu0 %v1148
        %v1150 = vpop.xlane.xlu0 %1149
        %v1151 = vsub.f32 %v995, %v1141
        %v1152 = vsub.f32 %v1041, %v1144
        %v1153 = vsub.f32 %v1087, %v1147
        %v1154 = vsub.f32 %v1133, %v1150
        %v1155 = vmul.f32 %v1151, 1.442695
        %v1156 = vpow.pop %v1155
        %v1157 = vmul.f32 %v1152, 1.442695
        %v1158 = vpow.pop %v1157
        %v1159 = vmul.f32 %v1153, 1.442695
        %v1160 = vpow.pop %v1159
        %v1161 = vmul.f32 %v1154, 1.442695
        %v1162 = vpow.pop %v1161
        %v1163 = vsel %vm1138, %v1156, 0.0
        %1164 = vadd.xlane.f32.xlu0 %v1163
        %v1165 = vpop.xlane.xlu0 %1164
        %v1166 = vsel %vm1138, %v1158, 0.0
        %1167 = vadd.xlane.f32.xlu0 %v1166
        %v1168 = vpop.xlane.xlu0 %1167
        %v1169 = vsel %vm1138, %v1160, 0.0
        %1170 = vadd.xlane.f32.xlu0 %v1169
        %v1171 = vpop.xlane.xlu0 %1170
        %v1172 = vsel %vm1138, %v1162, 0.0
        %1173 = vadd.xlane.f32.xlu0 %v1172
        %v1174 = vpop.xlane.xlu0 %1173
        %v1175 = vpack.c.bf16 %v1156, %v1156
        %v1176 = vpack.c.bf16 %v1158, %v1158
        %v1177 = vpack.c.bf16 %v1160, %v1160
        %v1178 = vpack.c.bf16 %v1162, %v1162
        %v1180 = vsel %vm1138, %v1175, 0
        %vm1182 = vcmask 1043456
        %v1184 = vsel %vm1182, %v948, 0
        %1186 = vmatprep.subr.bf16.mxu0 0
        %1187 = vmatpush1.bf16.msra.mxu0 %v1184
        %1188 = vmatprep.subr.bf16.mxu0 0
        %1189 = vmatpush1.bf16.msra.mxu0 0
        %1190 = vmatprep.subr.bf16.mxu0 0
        %1191 = vmatpush1.bf16.msra.mxu0 0
        %1192 = vmatprep.subr.bf16.mxu0 0
        %1193 = vmatpush1.bf16.msra.mxu0 0
        %1194 = vmatprep.subr.bf16.mxu0 0
        %1195 = vmatpush1.bf16.msra.mxu0 0
        %1196 = vmatprep.subr.bf16.mxu0 0
        %1197 = vmatpush1.bf16.msra.mxu0 0
        %1198 = vmatprep.subr.bf16.mxu0 0
        %1199 = vmatpush1.bf16.msra.mxu0 0
        %1200 = vmatprep.subr.bf16.mxu0 0
        %1201 = vmatpush1.bf16.msra.mxu0 0
        %1202 = vmatprep.subr.bf16.mxu0 0
        %1203 = vmatpush1.bf16.msra.mxu0 0
        %1204 = vmatprep.subr.bf16.mxu0 0
        %1205 = vmatpush1.bf16.msra.mxu0 0
        %1206 = vmatprep.subr.bf16.mxu0 0
        %1207 = vmatpush1.bf16.msra.mxu0 0
        %1208 = vmatprep.subr.bf16.mxu0 0
        %1209 = vmatpush1.bf16.msra.mxu0 0
        %1210 = vmatprep.subr.bf16.mxu0 0
        %1211 = vmatpush1.bf16.msra.mxu0 0
        %1212 = vmatprep.subr.bf16.mxu0 0
        %1213 = vmatpush1.bf16.msra.mxu0 0
        %1214 = vmatprep.subr.bf16.mxu0 0
        %1215 = vmatpush1.bf16.msra.mxu0 0
        %1216 = vmatprep.subr.bf16.mxu0 0
        %1217 = vmatpush1.bf16.msra.mxu0 0
        %1218 = vmatprep.mubr.bf16.mxu0 0
        %1219 = vmatmul.mubr.bf16.gmra.mrb[0].mxu0 %v1180
        %v1220 = vpop.f32.mrb[0].mxu0
        %v1221 = vadd.f32 0.0, %v1220
        %v1222 = vpop.f32.mrb[0].mxu0
        %v1223 = vpop.f32.mrb[0].mxu0
        %v1224 = vpop.f32.mrb[0].mxu0
        %1225 = vdwg.mxu0
        %v1227 = vsel %vm1138, %v1176, 0
        %v1230 = vsel %vm1182, %v949, 0
        %1232 = vmatprep.subr.bf16.mxu0 0
        %1233 = vmatpush1.bf16.msra.mxu0 %v1230
        %1234 = vmatprep.subr.bf16.mxu0 0
        %1235 = vmatpush1.bf16.msra.mxu0 0
        %1236 = vmatprep.subr.bf16.mxu0 0
        %1237 = vmatpush1.bf16.msra.mxu0 0
        %1238 = vmatprep.subr.bf16.mxu0 0
        %1239 = vmatpush1.bf16.msra.mxu0 0
        %1240 = vmatprep.subr.bf16.mxu0 0
        %1241 = vmatpush1.bf16.msra.mxu0 0
        %1242 = vmatprep.subr.bf16.mxu0 0
        %1243 = vmatpush1.bf16.msra.mxu0 0
        %1244 = vmatprep.subr.bf16.mxu0 0
        %1245 = vmatpush1.bf16.msra.mxu0 0
        %1246 = vmatprep.subr.bf16.mxu0 0
        %1247 = vmatpush1.bf16.msra.mxu0 0
        %1248 = vmatprep.subr.bf16.mxu0 0
        %1249 = vmatpush1.bf16.msra.mxu0 0
        %1250 = vmatprep.subr.bf16.mxu0 0
        %1251 = vmatpush1.bf16.msra.mxu0 0
        %1252 = vmatprep.subr.bf16.mxu0 0
        %1253 = vmatpush1.bf16.msra.mxu0 0
        %1254 = vmatprep.subr.bf16.mxu0 0
        %1255 = vmatpush1.bf16.msra.mxu0 0
        %1256 = vmatprep.subr.bf16.mxu0 0
        %1257 = vmatpush1.bf16.msra.mxu0 0
        %1258 = vmatprep.subr.bf16.mxu0 0
        %1259 = vmatpush1.bf16.msra.mxu0 0
        %1260 = vmatprep.subr.bf16.mxu0 0
        %1261 = vmatpush1.bf16.msra.mxu0 0
        %1262 = vmatprep.subr.bf16.mxu0 0
        %1263 = vmatpush1.bf16.msra.mxu0 0
        %1264 = vmatprep.mubr.bf16.mxu0 0
        %1265 = vmatmul.mubr.bf16.gmra.mrb[0].mxu0 %v1227
        %v1266 = vpop.f32.mrb[0].mxu0
        %v1267 = vadd.f32 0.0, %v1266
        %v1268 = vpop.f32.mrb[0].mxu0
        %v1269 = vpop.f32.mrb[0].mxu0
        %v1270 = vpop.f32.mrb[0].mxu0
        %1271 = vdwg.mxu0
        %v1273 = vsel %vm1138, %v1177, 0
        %v1276 = vsel %vm1182, %v950, 0
        %1278 = vmatprep.subr.bf16.mxu0 0
        %1279 = vmatpush1.bf16.msra.mxu0 %v1276
        %1280 = vmatprep.subr.bf16.mxu0 0
        %1281 = vmatpush1.bf16.msra.mxu0 0
        %1282 = vmatprep.subr.bf16.mxu0 0
        %1283 = vmatpush1.bf16.msra.mxu0 0
        %1284 = vmatprep.subr.bf16.mxu0 0
        %1285 = vmatpush1.bf16.msra.mxu0 0
        %1286 = vmatprep.subr.bf16.mxu0 0
        %1287 = vmatpush1.bf16.msra.mxu0 0
        %1288 = vmatprep.subr.bf16.mxu0 0
        %1289 = vmatpush1.bf16.msra.mxu0 0
        %1290 = vmatprep.subr.bf16.mxu0 0
        %1291 = vmatpush1.bf16.msra.mxu0 0
        %1292 = vmatprep.subr.bf16.mxu0 0
        %1293 = vmatpush1.bf16.msra.mxu0 0
        %1294 = vmatprep.subr.bf16.mxu0 0
        %1295 = vmatpush1.bf16.msra.mxu0 0
        %1296 = vmatprep.subr.bf16.mxu0 0
        %1297 = vmatpush1.bf16.msra.mxu0 0
        %1298 = vmatprep.subr.bf16.mxu0 0
        %1299 = vmatpush1.bf16.msra.mxu0 0
        %1300 = vmatprep.subr.bf16.mxu0 0
        %1301 = vmatpush1.bf16.msra.mxu0 0
        %1302 = vmatprep.subr.bf16.mxu0 0
        %1303 = vmatpush1.bf16.msra.mxu0 0
        %1304 = vmatprep.subr.bf16.mxu0 0
        %1305 = vmatpush1.bf16.msra.mxu0 0
        %1306 = vmatprep.subr.bf16.mxu0 0
        %1307 = vmatpush1.bf16.msra.mxu0 0
        %1308 = vmatprep.subr.bf16.mxu0 0
        %1309 = vmatpush1.bf16.msra.mxu0 0
        %1310 = vmatprep.mubr.bf16.mxu0 0
        %1311 = vmatmul.mubr.bf16.gmra.mrb[0].mxu0 %v1273
        %v1312 = vpop.f32.mrb[0].mxu0
        %v1313 = vadd.f32 0.0, %v1312
        %v1314 = vpop.f32.mrb[0].mxu0
        %v1315 = vpop.f32.mrb[0].mxu0
        %v1316 = vpop.f32.mrb[0].mxu0
        %1317 = vdwg.mxu0
        %v1319 = vsel %vm1138, %v1178, 0
        %v1322 = vsel %vm1182, %v951, 0
        %1324 = vmatprep.subr.bf16.mxu0 0
        %1325 = vmatpush1.bf16.msra.mxu0 %v1322
        %1326 = vmatprep.subr.bf16.mxu0 0
        %1327 = vmatpush1.bf16.msra.mxu0 0
        %1328 = vmatprep.subr.bf16.mxu0 0
        %1329 = vmatpush1.bf16.msra.mxu0 0
        %1330 = vmatprep.subr.bf16.mxu0 0
        %1331 = vmatpush1.bf16.msra.mxu0 0
        %1332 = vmatprep.subr.bf16.mxu0 0
        %1333 = vmatpush1.bf16.msra.mxu0 0
        %1334 = vmatprep.subr.bf16.mxu0 0
        %1335 = vmatpush1.bf16.msra.mxu0 0
        %1336 = vmatprep.subr.bf16.mxu0 0
        %1337 = vmatpush1.bf16.msra.mxu0 0
        %1338 = vmatprep.subr.bf16.mxu0 0
        %1339 = vmatpush1.bf16.msra.mxu0 0
        %1340 = vmatprep.subr.bf16.mxu0 0
        %1341 = vmatpush1.bf16.msra.mxu0 0
        %1342 = vmatprep.subr.bf16.mxu0 0
        %1343 = vmatpush1.bf16.msra.mxu0 0
        %1344 = vmatprep.subr.bf16.mxu0 0
        %1345 = vmatpush1.bf16.msra.mxu0 0
        %1346 = vmatprep.subr.bf16.mxu0 0
        %1347 = vmatpush1.bf16.msra.mxu0 0
        %1348 = vmatprep.subr.bf16.mxu0 0
        %1349 = vmatpush1.bf16.msra.mxu0 0
        %1350 = vmatprep.subr.bf16.mxu0 0
        %1351 = vmatpush1.bf16.msra.mxu0 0
        %1352 = vmatprep.subr.bf16.mxu0 0
        %1353 = vmatpush1.bf16.msra.mxu0 0
        %1354 = vmatprep.subr.bf16.mxu0 0
        %1355 = vmatpush1.bf16.msra.mxu0 0
        %1356 = vmatprep.mubr.bf16.mxu0 0
        %1357 = vmatmul.mubr.bf16.gmra.mrb[0].mxu0 %v1319
        %v1358 = vpop.f32.mrb[0].mxu0
        %v1359 = vadd.f32 0.0, %v1358
        %v1360 = vpop.f32.mrb[0].mxu0
        %v1361 = vpop.f32.mrb[0].mxu0
        %v1362 = vpop.f32.mrb[0].mxu0
        %1363 = vdwg.mxu0
        %v1364 = vrcp.pop %v1165
        %v1365 = vrcp.pop %v1168
        %v1366 = vrcp.pop %v1171
        %v1367 = vrcp.pop %v1174
        %v1368 = vmul.f32 %v1221, %v1364
        %v1369 = vmul.f32 %v1267, %v1365
        %v1370 = vmul.f32 %v1313, %v1366
        %v1371 = vmul.f32 %v1359, %v1367
        %v1372 = vcombine.low %v1368, %v1370
        %v1373 = vcombine.high %v1368, %v1370
        %v1375 = vunpack.c.l.s4 1983009808
        %v1376 = vunpack.c.0.s8 %v1375
        %v1377 = vlaneseq
        %v1378 = vshrl.u32 %v1377, 7
        %v1379 = vsub.s32 %v1376, %v1378
        %v1380 = vrot.slane %v1372, %v1379
        %v1382 = vunpack.c.l.s4 1983009808
        %v1383 = vunpack.c.0.s8 %v1382
        %v1384 = vlaneseq
        %v1385 = vshrl.u32 %v1384, 7
        %v1386 = vsub.s32 %v1383, %v1385
        %v1387 = vrot.slane %v1373, %v1386
        %v1388 = vcombine.low %v1369, %v1371
        %v1389 = vcombine.high %v1369, %v1371
        %v1391 = vunpack.c.l.s4 1983009808
        %v1392 = vunpack.c.0.s8 %v1391
        %v1393 = vlaneseq
        %v1394 = vshrl.u32 %v1393, 7
        %v1395 = vsub.s32 %v1392, %v1394
        %v1396 = vrot.slane %v1388, %v1395
        %v1398 = vunpack.c.l.s4 1983009808
        %v1399 = vunpack.c.0.s8 %v1398
        %v1400 = vlaneseq
        %v1401 = vshrl.u32 %v1400, 7
        %v1402 = vsub.s32 %v1399, %v1401
        %v1403 = vrot.slane %v1389, %v1402
        %v1404 = vcombine.low %v1380, %v1396
        %v1405 = vcombine.high %v1380, %v1396
        %v1407 = vunpack.c.l.s4 1934713408
        %v1408 = vunpack.c.0.s8 %v1407
        %v1409 = vlaneseq
        %v1410 = vshrl.u32 %v1409, 7
        %v1411 = vsub.s32 %v1408, %v1410
        %v1412 = vrot.slane %v1404, %v1411
        %v1414 = vunpack.c.l.s4 1934713408
        %v1415 = vunpack.c.0.s8 %v1414
        %v1416 = vlaneseq
        %v1417 = vshrl.u32 %v1416, 7
        %v1418 = vsub.s32 %v1415, %v1417
        %v1419 = vrot.slane %v1405, %v1418
        %v1420 = vcombine.low %v1387, %v1403
        %v1421 = vcombine.high %v1387, %v1403
        %v1423 = vunpack.c.l.s4 1934713408
        %v1424 = vunpack.c.0.s8 %v1423
        %v1425 = vlaneseq
        %v1426 = vshrl.u32 %v1425, 7
        %v1427 = vsub.s32 %v1424, %v1426
        %v1428 = vrot.slane %v1420, %v1427
        %v1430 = vunpack.c.l.s4 1934713408
        %v1431 = vunpack.c.0.s8 %v1430
        %v1432 = vlaneseq
        %v1433 = vshrl.u32 %v1432, 7
        %v1434 = vsub.s32 %v1431, %v1433
        %v1435 = vrot.slane %v1421, %v1434
        %v1436 = vcombine.high %v1412, 0.0
        %v1437 = vcombine.high %v1419, 0.0
        %v1438 = vcombine.high %v1428, 0.0
        %v1439 = vcombine.high %v1435, 0.0
        %v1440 = vcombine.low %v1412, %v1419
        %v1442 = vunpack.c.l.s4 1983009808
        %v1443 = vunpack.c.0.s8 %v1442
        %v1444 = vlaneseq
        %v1445 = vshrl.u32 %v1444, 7
        %v1446 = vsub.s32 %v1443, %v1445
        %v1447 = vrot.slane %v1440, %v1446
        %v1448 = vcombine.low %v1436, %v1437
        %v1450 = vunpack.c.l.s4 1983009808
        %v1451 = vunpack.c.0.s8 %v1450
        %v1452 = vlaneseq
        %v1453 = vshrl.u32 %v1452, 7
        %v1454 = vsub.s32 %v1451, %v1453
        %v1455 = vrot.slane %v1448, %v1454
        %v1456 = vcombine.low %v1428, %v1435
        %v1458 = vunpack.c.l.s4 1983009808
        %v1459 = vunpack.c.0.s8 %v1458
        %v1460 = vlaneseq
        %v1461 = vshrl.u32 %v1460, 7
        %v1462 = vsub.s32 %v1459, %v1461
        %v1463 = vrot.slane %v1456, %v1462
        %v1464 = vcombine.low %v1438, %v1439
        %v1466 = vunpack.c.l.s4 1983009808
        %v1467 = vunpack.c.0.s8 %v1466
        %v1468 = vlaneseq
        %v1469 = vshrl.u32 %v1468, 7
        %v1470 = vsub.s32 %v1467, %v1469
        %v1471 = vrot.slane %v1464, %v1470
        %v1472 = vcombine.low %v1447, %v1455
        %v1473 = vcombine.high %v1447, %v1455
        %v1475 = vunpack.c.l.s4 1934713408
        %v1476 = vunpack.c.0.s8 %v1475
        %v1477 = vlaneseq
        %v1478 = vshrl.u32 %v1477, 7
        %v1479 = vsub.s32 %v1476, %v1478
        %v1480 = vrot.slane %v1472, %v1479
        %v1482 = vunpack.c.l.s4 1934713408
        %v1483 = vunpack.c.0.s8 %v1482
        %v1484 = vlaneseq
        %v1485 = vshrl.u32 %v1484, 7
        %v1486 = vsub.s32 %v1483, %v1485
        %v1487 = vrot.slane %v1473, %v1486
        %v1488 = vcombine.low %v1463, %v1471
        %v1489 = vcombine.high %v1463, %v1471
        %v1491 = vunpack.c.l.s4 1934713408
        %v1492 = vunpack.c.0.s8 %v1491
        %v1493 = vlaneseq
        %v1494 = vshrl.u32 %v1493, 7
        %v1495 = vsub.s32 %v1492, %v1494
        %v1496 = vrot.slane %v1488, %v1495
        %v1498 = vunpack.c.l.s4 1934713408
        %v1499 = vunpack.c.0.s8 %v1498
        %v1500 = vlaneseq
        %v1501 = vshrl.u32 %v1500, 7
        %v1502 = vsub.s32 %v1499, %v1501
        %v1503 = vrot.slane %v1489, %v1502
        %v1504 = vcombine.low %v1480, %v1496
        %v1505 = vcombine.high %v1480, %v1496
        %v1506 = vcombine.low %v1487, %v1503
        %v1507 = vcombine.high %v1487, %v1503
        %1509 = vrot.lane.b32.xlu0 %v1505, 16
        %v1510 = vpop.permute.xlu0 %1509
        %1513 = vrot.lane.b32.xlu0 %v1506, 32
        %v1514 = vpop.permute.xlu0 %1513
        %1517 = vrot.lane.b32.xlu0 %v1507, 48
        %v1518 = vpop.permute.xlu0 %1517
        %v1520 = vsel %vm953, %v1504, %v1510
        %vm1521 = vcmask 261120
        %v1522 = vsel %vm1521, %v1520, %v1514
        %vm1523 = vcmask 392192
        %v1524 = vsel %vm1523, %v1522, %v1518
        %v1525 = vpack.c.bf16 %v1524, %v1524
        %v1526 = vld [vmem:[#allocation7] sm:$0xf]
        %v1527 = vld [vmem:[#allocation7 + $0x4] sm:$0xf]
        %v1528 = vld [vmem:[#allocation7 + $0x8] sm:$0xf]
        %v1529 = vld [vmem:[#allocation7 + $0xc] sm:$0xf]
        %v1530 = vld [vmem:[#allocation7 + $0x10] sm:$0xf]
        %v1531 = vld [vmem:[#allocation7 + $0x14] sm:$0xf]
        %v1532 = vld [vmem:[#allocation7 + $0x18] sm:$0xf]
        %v1533 = vld [vmem:[#allocation7 + $0x1c] sm:$0xf]
        %v1542 = vunpack.c.l.b16 %v1526
        %v1543 = vunpack.c.l.b16 %v1527
        %v1544 = vunpack.c.l.b16 %v1528
        %v1545 = vunpack.c.l.b16 %v1529
        %v1546 = vunpack.c.l.b16 %v1530
        %v1547 = vunpack.c.l.b16 %v1531
        %v1548 = vunpack.c.l.b16 %v1532
        %v1549 = vunpack.c.l.b16 %v1533
        %v1550 = vpack.c.b16 %v1543, %v1542
        %v1551 = vpack.c.b16 %v1545, %v1544
        %v1552 = vpack.c.b16 %v1547, %v1546
        %v1553 = vpack.c.b16 %v1549, %v1548
        %v1559 = vsel %vm384, %v1525, 0
        %1561 = vmatprep.subr.bf16.mxu0 0
        %1562 = vmatpush1.bf16.msra.mxu0 %v1550
        %1563 = vmatprep.subr.bf16.mxu0 0
        %1564 = vmatpush1.bf16.msra.mxu0 %v1551
        %1565 = vmatprep.subr.bf16.mxu0 0
        %1566 = vmatpush1.bf16.msra.mxu0 %v1552
        %1567 = vmatprep.subr.bf16.mxu0 0
        %1568 = vmatpush1.bf16.msra.mxu0 %v1553
        %1569 = vmatprep.subr.bf16.mxu0 0
        %1570 = vmatpush1.bf16.msra.mxu0 0
        %1571 = vmatprep.subr.bf16.mxu0 0
        %1572 = vmatpush1.bf16.msra.mxu0 0
        %1573 = vmatprep.subr.bf16.mxu0 0
        %1574 = vmatpush1.bf16.msra.mxu0 0
        %1575 = vmatprep.subr.bf16.mxu0 0
        %1576 = vmatpush1.bf16.msra.mxu0 0
        %1577 = vmatprep.subr.bf16.mxu0 0
        %1578 = vmatpush1.bf16.msra.mxu0 0
        %1579 = vmatprep.subr.bf16.mxu0 0
        %1580 = vmatpush1.bf16.msra.mxu0 0
        %1581 = vmatprep.subr.bf16.mxu0 0
        %1582 = vmatpush1.bf16.msra.mxu0 0
        %1583 = vmatprep.subr.bf16.mxu0 0
        %1584 = vmatpush1.bf16.msra.mxu0 0
        %1585 = vmatprep.subr.bf16.mxu0 0
        %1586 = vmatpush1.bf16.msra.mxu0 0
        %1587 = vmatprep.subr.bf16.mxu0 0
        %1588 = vmatpush1.bf16.msra.mxu0 0
        %1589 = vmatprep.subr.bf16.mxu0 0
        %1590 = vmatpush1.bf16.msra.mxu0 0
        %1591 = vmatprep.subr.bf16.mxu0 0
        %1592 = vmatpush1.bf16.msra.mxu0 0
        %1593 = vmatprep.mubr.bf16.mxu0 0
        %1594 = vmatmul.mubr.bf16.gmra.mrb[0].mxu0 %v1559
        %v1595 = vpop.f32.mrb[0].mxu0
        %v1596 = vadd.f32 0.0, %v1595
        %v1597 = vpop.f32.mrb[0].mxu0
        %v1598 = vpop.f32.mrb[0].mxu0
        %v1599 = vpop.f32.mrb[0].mxu0
        %1600 = vdwg.mxu0
        %1601 = vst.msk [vmem:[%s333] sm:$0xff] %vm384, %v1596
        %s1602 = sand.u32 %s165, 1
        %s1603 = scalar_lea.sflag [#allocation4], %s1602
        %s1604 = sand.u32 %s165, 1
        %s1605 = smul.addr %s1604, 8
        %s1606 = scalar_lea.vmem [#allocation13], %s1605
        // Predicated region
        $region69: #{tpu_custom_call.1} parent=43 // pred_check
          %p1607 = pneg %p175
        $region70: #{tpu_custom_call.1} parent=43 // pred_check_branch
          %1609 = sbr.rel (%p1607) target = $region72
        $region71: #{tpu_custom_call.1} parent=43 // pred_region
          %s1611 = ssub.s32 128, 128
          %1612 = vsyncadd %s1603, %s1611
          %s1613 = smul.addr %s26, 128
          %s1614 = scalar_lea.hbm %s6, %s1613
          %s1616 = sshll.u32 %s1606, 4
          %s1617 = int_to_ptr.vmem [resolvable:$true] %s1616
          %1619 = dma.vmem_to_hbm [thread:$0]  %s1617, 128, %s1614, %s1603
        $region72: #{tpu_custom_call.1} parent=43 // pred_fallthru
          _
      $region44: #{tpu_custom_call.1} parent=5 // pred_fallthru
        _
      %p1620 = scmp.le.s32.totalorder 2, %s21
      // Predicated region
      $region73: #{tpu_custom_call.1} parent=5 // pred_check
        %p1621 = pneg %p1620
      $region74: #{tpu_custom_call.1} parent=5 // pred_check_branch
        %1623 = sbr.rel (%p1621) target = $region76
      $region75: #{tpu_custom_call.1} parent=5 // pred_region
        %s1624 = ssub.s32 %s21, 2
        // Predicated region
        $region77: #{tpu_custom_call.1} parent=75 // pred_check
          %p1625 = pneg %p181
        $region78: #{tpu_custom_call.1} parent=75 // pred_check_branch
          %1627 = sbr.rel (%p1625) target = $region80
        $region79: #{tpu_custom_call.1} parent=75 // pred_region
          %s1628 = sand.u32 %s166, 1
          %s1629 = scalar_lea.sflag [#allocation4], %s1628
          %s1630 = sand.u32 %s166, 1
          %s1631 = smul.addr %s1630, 8
          %s1632 = scalar_lea.vmem [#allocation13], %s1631
          %1633 = dma.done %s1629, 128
        $region80: #{tpu_custom_call.1} parent=75 // pred_fallthru
          _
      $region76: #{tpu_custom_call.1} parent=5 // pred_fallthru
        _
    $region6: #{tpu_custom_call.1} parent=1 // loop_footer
      %s25 = sadd.s32 1, %s21
    $region7: #{tpu_custom_call.1} parent=1 // loop_footer_branch
      %20 = sbr.rel target = $region3
    $region8: #{tpu_custom_call.1} parent=1 // loop_exit
      _
    %1634 = vsyncpa [#allocation3], 1
    %s1635 = scalar_lea.sflag [#allocation3], 1
    %1636 = vsyncpa %s1635, 1
    %1637 = vsyncpa [#allocation6], 1
    %1638 = vsyncpa [#allocation9], 1
    %1639 = vsyncpa [#allocation12], 1
    %1640 = vsyncpa [#allocation4], 1
    %s1641 = scalar_lea.sflag [#allocation4], 1
    %1642 = vsyncpa %s1641, 1

</llo_original>
